<compile_context>
chip_gen: v5e
topology: v5e:2x2
jax: 0.10.0
libtpu: 0.0.40
codegen_flags: <defaults>
</compile_context>

<pallas_src>
import functools
import math

import jax
import jax.numpy as jnp
from jax import lax
from jax.experimental import pallas as pl
from jax.experimental.pallas import tpu as pltpu


# ------------------------------ helpers ------------------------------------

def _round_up(v, m):
    return (v + m - 1) // m * m


def _full_spec(shape):
    # Whole-array block (single grid point). block_shape == full dims is legal
    # regardless of (8, 128) divisibility.
    return pl.BlockSpec(shape, lambda: (0,) * len(shape))


def _padded_rfinal_columns(h, hp, k):
    """Column index, inside the lane-padded r_final of width (2**(k+1)-1)*hp,
    of every column of the *unpadded* r_final (width (2**(k+1)-1)*h), in order.

    This is the layout the fused kernel builds in its VMEM scratch: the
    level-i block has width 2**i * hp and its valid lanes follow the recursion
    valid_i = valid_{i-1} ++ (valid_{i-1} + 2**(i-1) * hp).
    Identity mapping when h == hp.
    """
    valid = list(range(h))          # valid lanes of r0 inside width hp
    width = hp
    cols = list(valid)              # level-0 block sits at offset 0
    offset = width
    for _ in range(k):
        valid = valid + [v + width for v in valid]
        width *= 2
        cols += [offset + v for v in valid]
        offset += width
    return jnp.asarray(cols, dtype=jnp.int32)


# ----------------------------- fused kernel ---------------------------------

def _h2gcn_fused_kernel(x_ref, a1_ref, a2_ref, we_ref, wc_ref, o_ref, r_ref,
                        *, k, hp, num_classes, use_relu, store_dtype):
    """Fused H2GCN forward: embed -> k propagation steps -> softmax classify.

    The activation chain (r0..rk == r_final) stays in the VMEM scratch `r_ref`
    of shape [NP, (2**(k+1)-1)*hp] (bf16). Every column offset is a multiple
    of 128, so all loads/stores are lane-dense and unmasked.
    """
    acc = jnp.float32

    def act(v):
        return jnp.maximum(v, 0.0) if use_relu else v

    # r0 = act(x @ w_embed)  -> first hp columns of the scratch.
    r0 = jnp.dot(x_ref[...], we_ref[...], preferred_element_type=acc)
    r_ref[:, 0:hp] = act(r0).astype(store_dtype)

    a1 = a1_ref[...]
    a2 = a2_ref[...]

    # Propagation chain: write a1@r and a2@r straight into the two column
    # halves of the next level's block (no concatenate, no HBM traffic).
    off_prev, width_prev = 0, hp
    for _ in range(k):
        r_prev = r_ref[:, off_prev:off_prev + width_prev]
        off = off_prev + width_prev
        r1 = jnp.dot(a1, r_prev, preferred_element_type=acc)
        r2 = jnp.dot(a2, r_prev, preferred_element_type=acc)
        r_ref[:, off:off + width_prev] = act(r1).astype(store_dtype)
        r_ref[:, off + width_prev:off + 2 * width_prev] = act(r2).astype(store_dtype)
        off_prev, width_prev = off, 2 * width_prev

    # Classify: softmax(r_final @ w_classify). Padded class columns (whose
    # weights are zero) are masked to -inf so they drop out of the softmax.
    logits = jnp.dot(r_ref[...], wc_ref[...], preferred_element_type=acc)
    col = lax.broadcasted_iota(jnp.int32, logits.shape, 1)
    logits = jnp.where(col < num_classes, logits, -1e30)
    m = jnp.max(logits, axis=1, keepdims=True)
    e = jnp.exp(logits - m)
    denom = jnp.sum(e, axis=1, keepdims=True)
    o_ref[...] = (e * pl.reciprocal(denom, approx=True)).astype(o_ref.dtype)


def h2gcn_forward_pallas(x, a1, a2, w_embed, w_classify, k, use_relu,
                         compute_dtype=jnp.bfloat16):
    n, f = x.shape
    h = w_embed.shape[1]
    c = w_classify.shape[1]
    assert w_classify.shape[0] == (2 ** (k + 1) - 1) * h

    npad = _round_up(n, 8)       # sublane alignment
    fp = _round_up(f, 128)       # lane-dense feature dim
    hp = _round_up(h, 128)       # lane-dense hidden dim
    cp = _round_up(c, 128)       # lane-dense class dim
    total_w = (2 ** (k + 1) - 1) * hp

    cd = compute_dtype
    # Zero padding is exact: padded rows/cols contribute nothing to the dots.
    x_p = jnp.zeros((npad, fp), cd).at[:n, :f].set(x.astype(cd))
    a1_p = jnp.zeros((npad, npad), cd).at[:n, :n].set(a1.astype(cd))
    a2_p = jnp.zeros((npad, npad), cd).at[:n, :n].set(a2.astype(cd))
    we_p = jnp.zeros((fp, hp), cd).at[:f, :h].set(w_embed.astype(cd))

    # Scatter w_classify rows into the lane-padded r_final layout; padded rows
    # stay zero, padded class columns stay zero (masked inside the kernel).
    cols = _padded_rfinal_columns(h, hp, k)
    wc_p = jnp.zeros((total_w, cp), cd).at[cols, :c].set(w_classify.astype(cd))

    kernel = functools.partial(
        _h2gcn_fused_kernel, k=k, hp=hp, num_classes=c,
        use_relu=use_relu, store_dtype=cd)

    out_p = pl.pallas_call(
        kernel,
        out_shape=jax.ShapeDtypeStruct((npad, cp), jnp.float32),
        in_specs=[_full_spec((npad, fp)), _full_spec((npad, npad)),
                  _full_spec((npad, npad)), _full_spec((fp, hp)),
                  _full_spec((total_w, cp))],
        out_specs=_full_spec((npad, cp)),
        scratch_shapes=[pltpu.VMEM((npad, total_w), cd)],
    )(x_p, a1_p, a2_p, we_p, wc_p)

    # TODO(synk): for N beyond a few thousand nodes, switch the whole-array
    # blocks to a row-tiled grid (node rows "parallel" for v7x's 2 TCs, the
    # contraction axis last + "arbitrary" with a VMEM accumulator).
    return out_p[:n, :c]


# --------------------------- graph preprocessing ----------------------------
# One-time glue equivalent of H2GCN._prepare_prop / _indicator / _adj_norm,
# executed densely in plain JAX (adj is a small dense [N, N] here).

def _indicator(a):
    return (a > 0).astype(jnp.float32)


def _adj_norm(a):
    d = jnp.sum(a, axis=1)
    inv_sqrt = jnp.where(d > 0, lax.rsqrt(jnp.where(d > 0, d, 1.0)), 0.0)
    return (a * inv_sqrt[:, None]) * inv_sqrt[None, :]


def prepare_prop(adj):
    n = adj.shape[0]
    eye = jnp.eye(n, dtype=adj.dtype)
    a1 = _indicator(adj - eye)
    a2 = _indicator(adj @ adj - adj - eye)
    return _adj_norm(a1), _adj_norm(a2)


# ------------------------- pure-JAX reference check -------------------------
# Mirrors the kernel's bf16 matmul inputs / f32 accumulation so the tolerance
# only needs to absorb accumulation-order and approx-reciprocal differences.

def h2gcn_reference(x, a1, a2, w_embed, w_classify, k, use_relu,
                    compute_dtype=jnp.bfloat16):
    cd = compute_dtype
    act = (lambda v: jnp.maximum(v, 0.0)) if use_relu else (lambda v: v)
    a1b, a2b = a1.astype(cd), a2.astype(cd)
    r = act(jnp.dot(x.astype(cd), w_embed.astype(cd),
                    preferred_element_type=jnp.float32)).astype(cd)
    rs = [r]
    for _ in range(k):
        r1 = jnp.dot(a1b, rs[-1], preferred_element_type=jnp.float32)
        r2 = jnp.dot(a2b, rs[-1], preferred_element_type=jnp.float32)
        rs.append(act(jnp.concatenate([r1, r2], axis=1)).astype(cd))
    r_final = jnp.concatenate(rs, axis=1)
    logits = jnp.dot(r_final, w_classify.astype(cd),
                     preferred_element_type=jnp.float32)
    return jax.nn.softmax(logits, axis=1)


# ---------------------------------- main ------------------------------------

def xavier_uniform(key, shape):
    fan_in, fan_out = shape
    limit = math.sqrt(6.0 / (fan_in + fan_out))
    return jax.random.uniform(key, shape, jnp.float32, -limit, limit)


if __name__ == "__main__":
    # small, deterministic synthetic problem (matches module defaults-ish)
    N = 64
    IN_FEATURES = 32
    HIDDEN = 32
    K = 2
    CLASS_NUM = 8
    USE_RELU = True

    key = jax.random.PRNGKey(0)
    k_x, k_adj, k_we, k_wc = jax.random.split(key, 4)

    # node features
    x = jax.random.normal(k_x, (N, IN_FEATURES), jnp.float32)

    # random symmetric adjacency with self-loops, then sym-normalized
    # (mimics sys_normalized_adjacency(adj) passed to forward in `fit`)
    rnd = jax.random.uniform(k_adj, (N, N))
    a = (rnd < 0.08).astype(jnp.float32)
    a = jnp.maximum(a, a.T)
    a = jnp.maximum(a, jnp.eye(N, dtype=jnp.float32))
    adj = _adj_norm(a)

    # parameters (xavier_uniform, as in reset_parameter)
    w_embed = xavier_uniform(k_we, (IN_FEATURES, HIDDEN))
    w_classify = xavier_uniform(k_wc, ((2 ** (K + 1) - 1) * HIDDEN, CLASS_NUM))

    # one-time graph prep (_prepare_prop), plain JAX glue
    a1, a2 = prepare_prop(adj)

    # TODO(synk): F.dropout is identity at inference (training=False); skipped.
    out = h2gcn_forward_pallas(x, a1, a2, w_embed, w_classify, K, USE_RELU)
    out = jax.block_until_ready(out)

    assert out.shape == (N, CLASS_NUM)
    # softmax rows sum to ~1 (approx reciprocal + bf16 matmuls)
    assert jnp.allclose(jnp.sum(out, axis=1), 1.0, atol=1e-2)
    # matches the (bf16-quantized) pure-JAX reference
    ref = h2gcn_reference(x, a1, a2, w_embed, w_classify, K, USE_RELU)
    assert jnp.allclose(out, ref, atol=2e-2), float(jnp.max(jnp.abs(out - ref)))

    print("KERNEL_OK")
</pallas_src>

<mosaic_0001>
module attributes {stable_mosaic.version = 11 : i64} {
  func.func @_h2gcn_fused_kernel(%arg0: memref<64x128xbf16, #tpu.memory_space<vmem>>, %arg1: memref<64x64xbf16, #tpu.memory_space<vmem>>, %arg2: memref<64x64xbf16, #tpu.memory_space<vmem>>, %arg3: memref<128x128xbf16, #tpu.memory_space<vmem>>, %arg4: memref<896x128xbf16, #tpu.memory_space<vmem>>, %arg5: memref<64x128xf32, #tpu.memory_space<vmem>>, %arg6: memref<64x896xbf16, #tpu.memory_space<vmem>>) attributes {dimension_semantics = [], scalar_prefetch = 0 : i64, scratch_operands = 1 : i64, tpu.core_type = #tpu.core_type<tc>} {
    %c0 = arith.constant 0 : index
    %c0_0 = arith.constant 0 : index
    %0 = vector.load %arg0[%c0, %c0_0] : memref<64x128xbf16, #tpu.memory_space<vmem>>, vector<64x128xbf16>
    %c0_1 = arith.constant 0 : index
    %c0_2 = arith.constant 0 : index
    %1 = vector.load %arg3[%c0_1, %c0_2] : memref<128x128xbf16, #tpu.memory_space<vmem>>, vector<128x128xbf16>
    %cst = arith.constant dense<0.000000e+00> : vector<64x128xf32>
    %2 = tpu.matmul %0, %1, %cst {dimension_numbers = #tpu.dot_dimension_numbers<[1], [0], [0], [1], [0, 0, 1, 1], [], []>} : vector<64x128xbf16>, vector<128x128xbf16>, vector<64x128xf32> -> vector<64x128xf32>
    %cst_3 = arith.constant 0.000000e+00 : f32
    %3 = vector.broadcast %cst_3 : f32 to vector<64x128xf32>
    %4 = arith.maximumf %2, %3 : vector<64x128xf32>
    %5 = arith.truncf %4 : vector<64x128xf32> to vector<64x128xbf16>
    %c0_4 = arith.constant 0 : index
    %c0_5 = arith.constant 0 : index
    %6 = vector.load %arg6[%c0_4, %c0_5] : memref<64x896xbf16, #tpu.memory_space<vmem>>, vector<64x128xbf16>
    tpu.vector_store %arg6[%c0_4, %c0_5], %5 {strides = array<i32>} : memref<64x896xbf16, #tpu.memory_space<vmem>>, vector<64x128xbf16>,
    %c0_6 = arith.constant 0 : index
    %c0_7 = arith.constant 0 : index
    %7 = vector.load %arg1[%c0_6, %c0_7] : memref<64x64xbf16, #tpu.memory_space<vmem>>, vector<64x64xbf16>
    %c0_8 = arith.constant 0 : index
    %c0_9 = arith.constant 0 : index
    %8 = vector.load %arg2[%c0_8, %c0_9] : memref<64x64xbf16, #tpu.memory_space<vmem>>, vector<64x64xbf16>
    %c0_10 = arith.constant 0 : index
    %c0_11 = arith.constant 0 : index
    %9 = vector.load %arg6[%c0_10, %c0_11] : memref<64x896xbf16, #tpu.memory_space<vmem>>, vector<64x128xbf16>
    %cst_12 = arith.constant dense<0.000000e+00> : vector<64x128xf32>
    %10 = tpu.matmul %7, %9, %cst_12 {dimension_numbers = #tpu.dot_dimension_numbers<[1], [0], [0], [1], [0, 0, 1, 1], [], []>} : vector<64x64xbf16>, vector<64x128xbf16>, vector<64x128xf32> -> vector<64x128xf32>
    %cst_13 = arith.constant dense<0.000000e+00> : vector<64x128xf32>
    %11 = tpu.matmul %8, %9, %cst_13 {dimension_numbers = #tpu.dot_dimension_numbers<[1], [0], [0], [1], [0, 0, 1, 1], [], []>} : vector<64x64xbf16>, vector<64x128xbf16>, vector<64x128xf32> -> vector<64x128xf32>
    %cst_14 = arith.constant 0.000000e+00 : f32
    %12 = vector.broadcast %cst_14 : f32 to vector<64x128xf32>
    %13 = arith.maximumf %10, %12 : vector<64x128xf32>
    %14 = arith.truncf %13 : vector<64x128xf32> to vector<64x128xbf16>
    %c0_15 = arith.constant 0 : index
    %c128 = arith.constant 128 : index
    %15 = vector.load %arg6[%c0_15, %c128] : memref<64x896xbf16, #tpu.memory_space<vmem>>, vector<64x128xbf16>
    tpu.vector_store %arg6[%c0_15, %c128], %14 {strides = array<i32>} : memref<64x896xbf16, #tpu.memory_space<vmem>>, vector<64x128xbf16>,
    %cst_16 = arith.constant 0.000000e+00 : f32
    %16 = vector.broadcast %cst_16 : f32 to vector<64x128xf32>
    %17 = arith.maximumf %11, %16 : vector<64x128xf32>
    %18 = arith.truncf %17 : vector<64x128xf32> to vector<64x128xbf16>
    %c0_17 = arith.constant 0 : index
    %c256 = arith.constant 256 : index
    %19 = vector.load %arg6[%c0_17, %c256] : memref<64x896xbf16, #tpu.memory_space<vmem>>, vector<64x128xbf16>
    tpu.vector_store %arg6[%c0_17, %c256], %18 {strides = array<i32>} : memref<64x896xbf16, #tpu.memory_space<vmem>>, vector<64x128xbf16>,
    %c0_18 = arith.constant 0 : index
    %c128_19 = arith.constant 128 : index
    %20 = vector.load %arg6[%c0_18, %c128_19] : memref<64x896xbf16, #tpu.memory_space<vmem>>, vector<64x256xbf16>
    %cst_20 = arith.constant dense<0.000000e+00> : vector<64x256xf32>
    %21 = tpu.matmul %7, %20, %cst_20 {dimension_numbers = #tpu.dot_dimension_numbers<[1], [0], [0], [1], [0, 0, 1, 1], [], []>} : vector<64x64xbf16>, vector<64x256xbf16>, vector<64x256xf32> -> vector<64x256xf32>
    %cst_21 = arith.constant dense<0.000000e+00> : vector<64x256xf32>
    %22 = tpu.matmul %8, %20, %cst_21 {dimension_numbers = #tpu.dot_dimension_numbers<[1], [0], [0], [1], [0, 0, 1, 1], [], []>} : vector<64x64xbf16>, vector<64x256xbf16>, vector<64x256xf32> -> vector<64x256xf32>
    %cst_22 = arith.constant 0.000000e+00 : f32
    %23 = vector.broadcast %cst_22 : f32 to vector<64x256xf32>
    %24 = arith.maximumf %21, %23 : vector<64x256xf32>
    %25 = arith.truncf %24 : vector<64x256xf32> to vector<64x256xbf16>
    %c0_23 = arith.constant 0 : index
    %c384 = arith.constant 384 : index
    %26 = vector.load %arg6[%c0_23, %c384] : memref<64x896xbf16, #tpu.memory_space<vmem>>, vector<64x256xbf16>
    tpu.vector_store %arg6[%c0_23, %c384], %25 {strides = array<i32>} : memref<64x896xbf16, #tpu.memory_space<vmem>>, vector<64x256xbf16>,
    %cst_24 = arith.constant 0.000000e+00 : f32
    %27 = vector.broadcast %cst_24 : f32 to vector<64x256xf32>
    %28 = arith.maximumf %22, %27 : vector<64x256xf32>
    %29 = arith.truncf %28 : vector<64x256xf32> to vector<64x256xbf16>
    %c0_25 = arith.constant 0 : index
    %c640 = arith.constant 640 : index
    %30 = vector.load %arg6[%c0_25, %c640] : memref<64x896xbf16, #tpu.memory_space<vmem>>, vector<64x256xbf16>
    tpu.vector_store %arg6[%c0_25, %c640], %29 {strides = array<i32>} : memref<64x896xbf16, #tpu.memory_space<vmem>>, vector<64x256xbf16>,
    %c0_26 = arith.constant 0 : index
    %c0_27 = arith.constant 0 : index
    %31 = vector.load %arg6[%c0_26, %c0_27] : memref<64x896xbf16, #tpu.memory_space<vmem>>, vector<64x896xbf16>
    %c0_28 = arith.constant 0 : index
    %c0_29 = arith.constant 0 : index
    %32 = vector.load %arg4[%c0_28, %c0_29] : memref<896x128xbf16, #tpu.memory_space<vmem>>, vector<896x128xbf16>
    %cst_30 = arith.constant dense<0.000000e+00> : vector<64x128xf32>
    %33 = tpu.matmul %31, %32, %cst_30 {dimension_numbers = #tpu.dot_dimension_numbers<[1], [0], [0], [1], [0, 0, 1, 1], [], []>} : vector<64x896xbf16>, vector<896x128xbf16>, vector<64x128xf32> -> vector<64x128xf32>
    %34 = tpu.iota {dimensions = array<i32: 1>} : vector<64x128xi32>
    %c8_i32 = arith.constant 8 : i32
    %35 = vector.broadcast %c8_i32 : i32 to vector<64x128xi32>
    %36 = arith.cmpi slt, %34, %35 : vector<64x128xi32>
    %cst_31 = arith.constant -1.000000e+30 : f32
    %37 = vector.broadcast %cst_31 : f32 to vector<64x128xf32>
    %38 = arith.select %36, %33, %37 : vector<64x128xi1>, vector<64x128xf32>
    %cst_32 = arith.constant dense<0xFF800000> : vector<64xf32>
    %39 = vector.multi_reduction <maximumf>, %38, %cst_32 [1] : vector<64x128xf32> to vector<64xf32>
    %40 = vector.shape_cast %39 : vector<64xf32> to vector<64x1xf32>
    %41 = vector.broadcast %40 : vector<64x1xf32> to vector<64x128xf32>
    %42 = arith.subf %38, %41 : vector<64x128xf32>
    %43 = math.exp %42 : vector<64x128xf32>
    %cst_33 = arith.constant dense<0.000000e+00> : vector<64xf32>
    %44 = vector.multi_reduction <add>, %43, %cst_33 [1] : vector<64x128xf32> to vector<64xf32>
    %45 = vector.shape_cast %44 : vector<64xf32> to vector<64x1xf32>
    %46 = tpu.reciprocal %45 {approx = true} : vector<64x1xf32> -> vector<64x1xf32>
    %47 = vector.broadcast %46 : vector<64x1xf32> to vector<64x128xf32>
    %48 = arith.mulf %43, %47 : vector<64x128xf32>
    %c0_34 = arith.constant 0 : index
    %c0_35 = arith.constant 0 : index
    %49 = vector.load %arg5[%c0_34, %c0_35] : memref<64x128xf32, #tpu.memory_space<vmem>>, vector<64x128xf32>
    tpu.vector_store %arg5[%c0_34, %c0_35], %48 {strides = array<i32>} : memref<64x128xf32, #tpu.memory_space<vmem>>, vector<64x128xf32>,
    return
  }
}

</mosaic_0001>

<llo_original>
// kernel: tpu_custom_call.1
$region0: #{tpu_custom_call.1}
  #allocation0 [shape = 'u32[]', space=smem, size = 0x4, offset = 0x4, fixed_abs, tag = 'smem constant byte address 0x4 - core index']
  #allocation1 [shape = 'u32[72,128]{1,0:T(1,128)}', space=vmem, size = 0x9000, scoped, tag = 'internal scratch']
  #allocation2 [shape = 'bf16[64,896]{1,0:T(8,128)(2,1)}', space=vmem, size = 0x1c000, scoped, tag = 'scratch operand']
  %s0 = inlined_call_operand.hbm [shape: bf16[64,128], index: 0, kind: input, shape index: {}]
  %s1 = inlined_call_operand.hbm [shape: bf16[64,64], index: 1, kind: input, shape index: {}]
  %s2 = inlined_call_operand.hbm [shape: bf16[64,64], index: 2, kind: input, shape index: {}]
  %s3 = inlined_call_operand.hbm [shape: bf16[128,128], index: 3, kind: input, shape index: {}]
  %s4 = inlined_call_operand.hbm [shape: bf16[896,128], index: 4, kind: input, shape index: {}]
  %s5 = inlined_call_operand.hbm [shape: f32[64,128], index: 5, kind: output, shape index: {}]
  %s6 = sld [smem:[#allocation0]]
  $region50: #{tpu_custom_call.1} parent=0
    _
  %s8 = ssub.s32 1, %s6
  %s9 = scalar_select 0, %s8, %s6
  $region1: #{tpu_custom_call.1} parent=0
    #allocation3 [shape = 'u8[16384]{0}', space=vmem, size = 0x4000, scoped, tag = 'input window, operand 0, single buffered']
    #allocation4 [shape = 's32[1]{0}', space=sflag, size = 0x4, scoped, tag = 'scoped memory for tpu_custom_call.1']
    #allocation5 [shape = 's32[1]{0}', space=sflag, size = 0x4, scoped, tag = 'scoped memory for tpu_custom_call.1']
    #allocation6 [shape = 'u8[16384]{0}', space=vmem, size = 0x4000, scoped, tag = 'input window, operand 1, single buffered']
    #allocation7 [shape = 's32[1]{0}', space=sflag, size = 0x4, scoped, tag = 'scoped memory for tpu_custom_call.1']
    #allocation8 [shape = 'u8[16384]{0}', space=vmem, size = 0x4000, scoped, tag = 'input window, operand 2, single buffered']
    #allocation9 [shape = 'u8[32768]{0}', space=vmem, size = 0x8000, scoped, tag = 'input window, operand 3, single buffered']
    #allocation10 [shape = 's32[1]{0}', space=sflag, size = 0x4, scoped, tag = 'scoped memory for tpu_custom_call.1']
    #allocation11 [shape = 'u8[229376]{0}', space=vmem, size = 0x38000, scoped, tag = 'input window, operand 4, single buffered']
    #allocation12 [shape = 'u8[32768]{0}', space=vmem, size = 0x8000, scoped, tag = 'output window, operand 0, single buffered']
    %10 = vsyncpa [#allocation4], 0
    %11 = vsyncpa [#allocation7], 0
    %12 = vsyncpa [#allocation10], 0
    %13 = vsyncpa [#allocation5], 0
    // Predicated region
    $region2: #{tpu_custom_call.1} parent=1 // pred_check
      _
    $region3: #{tpu_custom_call.1} parent=1 // pred_check_branch
      %15 = sbr.rel (0) target = $region5
    $region4: #{tpu_custom_call.1} parent=1 // pred_region
      %17 = vsyncadd [#allocation4], 0
      %s18 = sshll.u32 %s0, 4
      %s19 = int_to_ptr.hbm [resolvable:$true] %s18
      %s20 = sshll.u32 [#allocation3], 4
      %s21 = int_to_ptr.vmem [resolvable:$true] %s20
      %26 = dma.hbm_to_vmem [thread:$0]  %s19, 512, %s21, [#allocation4], 64, 64, 4
    $region5: #{tpu_custom_call.1} parent=1 // pred_fallthru
      _
    // Predicated region
    $region6: #{tpu_custom_call.1} parent=1 // pred_check
      _
    $region7: #{tpu_custom_call.1} parent=1 // pred_check_branch
      %28 = sbr.rel (0) target = $region9
    $region8: #{tpu_custom_call.1} parent=1 // pred_region
      %30 = vsyncadd [#allocation7], 0
      %s31 = sshll.u32 %s1, 4
      %s32 = int_to_ptr.hbm [resolvable:$true] %s31
      %s33 = sshll.u32 [#allocation6], 4
      %s34 = int_to_ptr.vmem [resolvable:$true] %s33
      %39 = dma.hbm_to_vmem [thread:$0]  %s32, 512, %s34, [#allocation7], 64, 64, 4
    $region9: #{tpu_custom_call.1} parent=1 // pred_fallthru
      _
    // Predicated region
    $region10: #{tpu_custom_call.1} parent=1 // pred_check
      _
    $region11: #{tpu_custom_call.1} parent=1 // pred_check_branch
      %41 = sbr.rel (0) target = $region13
    $region12: #{tpu_custom_call.1} parent=1 // pred_region
      %43 = vsyncadd [#allocation7], 0
      %s44 = sshll.u32 %s2, 4
      %s45 = int_to_ptr.hbm [resolvable:$true] %s44
      %s46 = sshll.u32 [#allocation8], 4
      %s47 = int_to_ptr.vmem [resolvable:$true] %s46
      %52 = dma.hbm_to_vmem [thread:$0]  %s45, 512, %s47, [#allocation7], 64, 64, 4
    $region13: #{tpu_custom_call.1} parent=1 // pred_fallthru
      _
    // Predicated region
    $region14: #{tpu_custom_call.1} parent=1 // pred_check
      _
    $region15: #{tpu_custom_call.1} parent=1 // pred_check_branch
      %54 = sbr.rel (0) target = $region17
    $region16: #{tpu_custom_call.1} parent=1 // pred_region
      %56 = vsyncadd [#allocation10], 0
      %s57 = sshll.u32 %s3, 4
      %s58 = int_to_ptr.hbm [resolvable:$true] %s57
      %s59 = sshll.u32 [#allocation9], 4
      %s60 = int_to_ptr.vmem [resolvable:$true] %s59
      %65 = dma.hbm_to_vmem [thread:$0]  %s58, 1024, %s60, [#allocation10], 64, 64, 4
    $region17: #{tpu_custom_call.1} parent=1 // pred_fallthru
      _
    // Predicated region
    $region18: #{tpu_custom_call.1} parent=1 // pred_check
      _
    $region19: #{tpu_custom_call.1} parent=1 // pred_check_branch
      %67 = sbr.rel (0) target = $region21
    $region20: #{tpu_custom_call.1} parent=1 // pred_region
      %69 = vsyncadd [#allocation10], 0
      %s70 = sshll.u32 %s4, 4
      %s71 = int_to_ptr.hbm [resolvable:$true] %s70
      %s72 = sshll.u32 [#allocation11], 4
      %s73 = int_to_ptr.vmem [resolvable:$true] %s72
      %78 = dma.hbm_to_vmem [thread:$0]  %s71, 7168, %s73, [#allocation10], 64, 64, 4
    $region21: #{tpu_custom_call.1} parent=1 // pred_fallthru
      _
    // Predicated region
    $region22: #{tpu_custom_call.1} parent=1 // pred_check
      _
    $region23: #{tpu_custom_call.1} parent=1 // pred_check_branch
      %80 = sbr.rel (0) target = $region25
    $region24: #{tpu_custom_call.1} parent=1 // pred_region
      %82 = dma.done [#allocation4], 512
    $region25: #{tpu_custom_call.1} parent=1 // pred_fallthru
      _
    // Predicated region
    $region26: #{tpu_custom_call.1} parent=1 // pred_check
      _
    $region27: #{tpu_custom_call.1} parent=1 // pred_check_branch
      %84 = sbr.rel (0) target = $region29
    $region28: #{tpu_custom_call.1} parent=1 // pred_region
      %86 = dma.done [#allocation7], 512
    $region29: #{tpu_custom_call.1} parent=1 // pred_fallthru
      _
    // Predicated region
    $region30: #{tpu_custom_call.1} parent=1 // pred_check
      _
    $region31: #{tpu_custom_call.1} parent=1 // pred_check_branch
      %88 = sbr.rel (0) target = $region33
    $region32: #{tpu_custom_call.1} parent=1 // pred_region
      %90 = dma.done [#allocation7], 512
    $region33: #{tpu_custom_call.1} parent=1 // pred_fallthru
      _
    // Predicated region
    $region34: #{tpu_custom_call.1} parent=1 // pred_check
      _
    $region35: #{tpu_custom_call.1} parent=1 // pred_check_branch
      %92 = sbr.rel (0) target = $region37
    $region36: #{tpu_custom_call.1} parent=1 // pred_region
      %94 = dma.done [#allocation10], 1024
    $region37: #{tpu_custom_call.1} parent=1 // pred_fallthru
      _
    // Predicated region
    $region38: #{tpu_custom_call.1} parent=1 // pred_check
      _
    $region39: #{tpu_custom_call.1} parent=1 // pred_check_branch
      %96 = sbr.rel (0) target = $region41
    $region40: #{tpu_custom_call.1} parent=1 // pred_region
      %98 = dma.done [#allocation10], 7168
    $region41: #{tpu_custom_call.1} parent=1 // pred_fallthru
      _
    %v100 = vld [vmem:[#allocation3] sm:$0xf]
    %v101 = vld [vmem:[#allocation3 + $0x4] sm:$0xf]
    %v102 = vld [vmem:[#allocation3 + $0x8] sm:$0xf]
    %v103 = vld [vmem:[#allocation3 + $0xc] sm:$0xf]
    %v104 = vld [vmem:[#allocation3 + $0x10] sm:$0xf]
    %v105 = vld [vmem:[#allocation3 + $0x14] sm:$0xf]
    %v106 = vld [vmem:[#allocation3 + $0x18] sm:$0xf]
    %v107 = vld [vmem:[#allocation3 + $0x1c] sm:$0xf]
    %v108 = vld [vmem:[#allocation9] sm:$0xf]
    %v109 = vld [vmem:[#allocation9 + $0x4] sm:$0xf]
    %v110 = vld [vmem:[#allocation9 + $0x8] sm:$0xf]
    %v111 = vld [vmem:[#allocation9 + $0xc] sm:$0xf]
    %v112 = vld [vmem:[#allocation9 + $0x10] sm:$0xf]
    %v113 = vld [vmem:[#allocation9 + $0x14] sm:$0xf]
    %v114 = vld [vmem:[#allocation9 + $0x18] sm:$0xf]
    %v115 = vld [vmem:[#allocation9 + $0x1c] sm:$0xf]
    %v116 = vld [vmem:[#allocation9 + $0x20] sm:$0xf]
    %v117 = vld [vmem:[#allocation9 + $0x24] sm:$0xf]
    %v118 = vld [vmem:[#allocation9 + $0x28] sm:$0xf]
    %v119 = vld [vmem:[#allocation9 + $0x2c] sm:$0xf]
    %v120 = vld [vmem:[#allocation9 + $0x30] sm:$0xf]
    %v121 = vld [vmem:[#allocation9 + $0x34] sm:$0xf]
    %v122 = vld [vmem:[#allocation9 + $0x38] sm:$0xf]
    %v123 = vld [vmem:[#allocation9 + $0x3c] sm:$0xf]
    %v132 = vunpack.c.l.b16 %v100
    %v133 = vunpack.c.l.b16 %v101
    %v134 = vunpack.c.l.b16 %v102
    %v135 = vunpack.c.l.b16 %v103
    %v136 = vunpack.c.l.b16 %v104
    %v137 = vunpack.c.l.b16 %v105
    %v138 = vunpack.c.l.b16 %v106
    %v139 = vunpack.c.l.b16 %v107
    %v140 = vpack.c.b16 %v133, %v132
    %v141 = vpack.c.b16 %v135, %v134
    %v142 = vpack.c.b16 %v137, %v136
    %v143 = vpack.c.b16 %v139, %v138
    %v164 = vunpack.c.l.b16 %v108
    %v165 = vunpack.c.l.b16 %v109
    %v166 = vunpack.c.l.b16 %v110
    %v167 = vunpack.c.l.b16 %v111
    %v168 = vunpack.c.l.b16 %v112
    %v169 = vunpack.c.l.b16 %v113
    %v170 = vunpack.c.l.b16 %v114
    %v171 = vunpack.c.l.b16 %v115
    %v172 = vunpack.c.l.b16 %v116
    %v173 = vunpack.c.l.b16 %v117
    %v174 = vunpack.c.l.b16 %v118
    %v175 = vunpack.c.l.b16 %v119
    %v176 = vunpack.c.l.b16 %v120
    %v177 = vunpack.c.l.b16 %v121
    %v178 = vunpack.c.l.b16 %v122
    %v179 = vunpack.c.l.b16 %v123
    %v180 = vpack.c.b16 %v165, %v164
    %v181 = vpack.c.b16 %v167, %v166
    %v182 = vpack.c.b16 %v169, %v168
    %v183 = vpack.c.b16 %v171, %v170
    %v184 = vpack.c.b16 %v173, %v172
    %v185 = vpack.c.b16 %v175, %v174
    %v186 = vpack.c.b16 %v177, %v176
    %v187 = vpack.c.b16 %v179, %v178
    %196 = vmatpush.bf16.msra.mxu0 %v187
    %197 = vmatpush.bf16.msra.mxu0 %v186
    %198 = vmatpush.bf16.msra.mxu0 %v185
    %199 = vmatpush.bf16.msra.mxu0 %v184
    %200 = vmatpush.bf16.msra.mxu0 %v183
    %201 = vmatpush.bf16.msra.mxu0 %v182
    %202 = vmatpush.bf16.msra.mxu0 %v181
    %203 = vmatpush.bf16.msra.mxu0 %v180
    %204 = vmatmul.bf16.gmra.mxu0 %v140
    %v205 = vpop.f32.mrf.mxu0
    %v206 = vadd.f32 0.0, %v205
    %v207 = vpop.f32.mrf.mxu0
    %v208 = vadd.f32 0.0, %v207
    %209 = vmatmul.bf16.gmra.mxu0 %v141
    %v210 = vpop.f32.mrf.mxu0
    %v211 = vadd.f32 0.0, %v210
    %v212 = vpop.f32.mrf.mxu0
    %v213 = vadd.f32 0.0, %v212
    %214 = vmatmul.bf16.gmra.mxu0 %v142
    %v215 = vpop.f32.mrf.mxu0
    %v216 = vadd.f32 0.0, %v215
    %v217 = vpop.f32.mrf.mxu0
    %v218 = vadd.f32 0.0, %v217
    %219 = vmatmul.bf16.gmra.mxu0 %v143
    %v220 = vpop.f32.mrf.mxu0
    %v221 = vadd.f32 0.0, %v220
    %v222 = vpop.f32.mrf.mxu0
    %v223 = vadd.f32 0.0, %v222
    %224 = vdwg.mxu0
    %v225 = vmax.f32 %v206, 0.0
    %v226 = vmax.f32 %v208, 0.0
    %v227 = vmax.f32 %v211, 0.0
    %v228 = vmax.f32 %v213, 0.0
    %v229 = vmax.f32 %v216, 0.0
    %v230 = vmax.f32 %v218, 0.0
    %v231 = vmax.f32 %v221, 0.0
    %v232 = vmax.f32 %v223, 0.0
    %v233 = vpack.c.bf16 %v225, %v225
    %v234 = vpack.c.bf16 %v226, %v226
    %v235 = vpack.c.bf16 %v227, %v227
    %v236 = vpack.c.bf16 %v228, %v228
    %v237 = vpack.c.bf16 %v229, %v229
    %v238 = vpack.c.bf16 %v230, %v230
    %v239 = vpack.c.bf16 %v231, %v231
    %v240 = vpack.c.bf16 %v232, %v232
    %241 = vst [vmem:[#allocation2] sm:$0xf] %v233
    %242 = vst [vmem:[#allocation2 + $0x1c] sm:$0xf] %v234
    %243 = vst [vmem:[#allocation2 + $0x38] sm:$0xf] %v235
    %244 = vst [vmem:[#allocation2 + $0x54] sm:$0xf] %v236
    %245 = vst [vmem:[#allocation2 + $0x70] sm:$0xf] %v237
    %246 = vst [vmem:[#allocation2 + $0x8c] sm:$0xf] %v238
    %247 = vst [vmem:[#allocation2 + $0xa8] sm:$0xf] %v239
    %248 = vst [vmem:[#allocation2 + $0xc4] sm:$0xf] %v240
    %v249 = vld [vmem:[#allocation6] sm:$0xf]
    %v250 = vld [vmem:[#allocation6 + $0x4] sm:$0xf]
    %v251 = vld [vmem:[#allocation6 + $0x8] sm:$0xf]
    %v252 = vld [vmem:[#allocation6 + $0xc] sm:$0xf]
    %v253 = vld [vmem:[#allocation6 + $0x10] sm:$0xf]
    %v254 = vld [vmem:[#allocation6 + $0x14] sm:$0xf]
    %v255 = vld [vmem:[#allocation6 + $0x18] sm:$0xf]
    %v256 = vld [vmem:[#allocation6 + $0x1c] sm:$0xf]
    %v257 = vld [vmem:[#allocation8] sm:$0xf]
    %v258 = vld [vmem:[#allocation8 + $0x4] sm:$0xf]
    %v259 = vld [vmem:[#allocation8 + $0x8] sm:$0xf]
    %v260 = vld [vmem:[#allocation8 + $0xc] sm:$0xf]
    %v261 = vld [vmem:[#allocation8 + $0x10] sm:$0xf]
    %v262 = vld [vmem:[#allocation8 + $0x14] sm:$0xf]
    %v263 = vld [vmem:[#allocation8 + $0x18] sm:$0xf]
    %v264 = vld [vmem:[#allocation8 + $0x1c] sm:$0xf]
    %v265 = vld [vmem:[#allocation2] sm:$0xf]
    %v266 = vld [vmem:[#allocation2 + $0x1c] sm:$0xf]
    %v267 = vld [vmem:[#allocation2 + $0x38] sm:$0xf]
    %v268 = vld [vmem:[#allocation2 + $0x54] sm:$0xf]
    %v269 = vld [vmem:[#allocation2 + $0x70] sm:$0xf]
    %v270 = vld [vmem:[#allocation2 + $0x8c] sm:$0xf]
    %v271 = vld [vmem:[#allocation2 + $0xa8] sm:$0xf]
    %v272 = vld [vmem:[#allocation2 + $0xc4] sm:$0xf]
    %v281 = vunpack.c.l.b16 %v249
    %v282 = vunpack.c.l.b16 %v250
    %v283 = vunpack.c.l.b16 %v251
    %v284 = vunpack.c.l.b16 %v252
    %v285 = vunpack.c.l.b16 %v253
    %v286 = vunpack.c.l.b16 %v254
    %v287 = vunpack.c.l.b16 %v255
    %v288 = vunpack.c.l.b16 %v256
    %v289 = vpack.c.b16 %v282, %v281
    %v290 = vpack.c.b16 %v284, %v283
    %v291 = vpack.c.b16 %v286, %v285
    %v292 = vpack.c.b16 %v288, %v287
    %v301 = vunpack.c.l.b16 %v265
    %v302 = vunpack.c.l.b16 %v266
    %v303 = vunpack.c.l.b16 %v267
    %v304 = vunpack.c.l.b16 %v268
    %v305 = vunpack.c.l.b16 %v269
    %v306 = vunpack.c.l.b16 %v270
    %v307 = vunpack.c.l.b16 %v271
    %v308 = vunpack.c.l.b16 %v272
    %v309 = vpack.c.b16 %v302, %v301
    %v310 = vpack.c.b16 %v304, %v303
    %v311 = vpack.c.b16 %v306, %v305
    %v312 = vpack.c.b16 %v308, %v307
    %vm317 = vcmask 523264
    %v319 = vsel %vm317, %v289, 0
    %v322 = vsel %vm317, %v290, 0
    %v325 = vsel %vm317, %v291, 0
    %v328 = vsel %vm317, %v292, 0
    %330 = vmatpush.bf16.msra.mxu0 0
    %331 = vmatpush.bf16.msra.mxu0 0
    %332 = vmatpush.bf16.msra.mxu0 0
    %333 = vmatpush.bf16.msra.mxu0 0
    %334 = vmatpush.bf16.msra.mxu0 %v312
    %335 = vmatpush.bf16.msra.mxu0 %v311
    %336 = vmatpush.bf16.msra.mxu0 %v310
    %337 = vmatpush.bf16.msra.mxu0 %v309
    %338 = vmatmul.bf16.gmra.mxu0 %v319
    %v339 = vpop.f32.mrf.mxu0
    %v340 = vadd.f32 0.0, %v339
    %v341 = vpop.f32.mrf.mxu0
    %v342 = vadd.f32 0.0, %v341
    %343 = vmatmul.bf16.gmra.mxu0 %v322
    %v344 = vpop.f32.mrf.mxu0
    %v345 = vadd.f32 0.0, %v344
    %v346 = vpop.f32.mrf.mxu0
    %v347 = vadd.f32 0.0, %v346
    %348 = vmatmul.bf16.gmra.mxu0 %v325
    %v349 = vpop.f32.mrf.mxu0
    %v350 = vadd.f32 0.0, %v349
    %v351 = vpop.f32.mrf.mxu0
    %v352 = vadd.f32 0.0, %v351
    %353 = vmatmul.bf16.gmra.mxu0 %v328
    %v354 = vpop.f32.mrf.mxu0
    %v355 = vadd.f32 0.0, %v354
    %v356 = vpop.f32.mrf.mxu0
    %v357 = vadd.f32 0.0, %v356
    %358 = vdwg.mxu0
    %v367 = vunpack.c.l.b16 %v257
    %v368 = vunpack.c.l.b16 %v258
    %v369 = vunpack.c.l.b16 %v259
    %v370 = vunpack.c.l.b16 %v260
    %v371 = vunpack.c.l.b16 %v261
    %v372 = vunpack.c.l.b16 %v262
    %v373 = vunpack.c.l.b16 %v263
    %v374 = vunpack.c.l.b16 %v264
    %v375 = vpack.c.b16 %v368, %v367
    %v376 = vpack.c.b16 %v370, %v369
    %v377 = vpack.c.b16 %v372, %v371
    %v378 = vpack.c.b16 %v374, %v373
    %v380 = vsel %vm317, %v375, 0
    %v383 = vsel %vm317, %v376, 0
    %v386 = vsel %vm317, %v377, 0
    %v389 = vsel %vm317, %v378, 0
    %391 = vmatpush.bf16.msra.mxu0 0
    %392 = vmatpush.bf16.msra.mxu0 0
    %393 = vmatpush.bf16.msra.mxu0 0
    %394 = vmatpush.bf16.msra.mxu0 0
    %395 = vmatpush.bf16.msra.mxu0 %v312
    %396 = vmatpush.bf16.msra.mxu0 %v311
    %397 = vmatpush.bf16.msra.mxu0 %v310
    %398 = vmatpush.bf16.msra.mxu0 %v309
    %399 = vmatmul.bf16.gmra.mxu0 %v380
    %v400 = vpop.f32.mrf.mxu0
    %v401 = vadd.f32 0.0, %v400
    %v402 = vpop.f32.mrf.mxu0
    %v403 = vadd.f32 0.0, %v402
    %404 = vmatmul.bf16.gmra.mxu0 %v383
    %v405 = vpop.f32.mrf.mxu0
    %v406 = vadd.f32 0.0, %v405
    %v407 = vpop.f32.mrf.mxu0
    %v408 = vadd.f32 0.0, %v407
    %409 = vmatmul.bf16.gmra.mxu0 %v386
    %v410 = vpop.f32.mrf.mxu0
    %v411 = vadd.f32 0.0, %v410
    %v412 = vpop.f32.mrf.mxu0
    %v413 = vadd.f32 0.0, %v412
    %414 = vmatmul.bf16.gmra.mxu0 %v389
    %v415 = vpop.f32.mrf.mxu0
    %v416 = vadd.f32 0.0, %v415
    %v417 = vpop.f32.mrf.mxu0
    %v418 = vadd.f32 0.0, %v417
    %419 = vdwg.mxu0
    %v420 = vmax.f32 %v340, 0.0
    %v421 = vmax.f32 %v342, 0.0
    %v422 = vmax.f32 %v345, 0.0
    %v423 = vmax.f32 %v347, 0.0
    %v424 = vmax.f32 %v350, 0.0
    %v425 = vmax.f32 %v352, 0.0
    %v426 = vmax.f32 %v355, 0.0
    %v427 = vmax.f32 %v357, 0.0
    %v428 = vpack.c.bf16 %v420, %v420
    %v429 = vpack.c.bf16 %v421, %v421
    %v430 = vpack.c.bf16 %v422, %v422
    %v431 = vpack.c.bf16 %v423, %v423
    %v432 = vpack.c.bf16 %v424, %v424
    %v433 = vpack.c.bf16 %v425, %v425
    %v434 = vpack.c.bf16 %v426, %v426
    %v435 = vpack.c.bf16 %v427, %v427
    %436 = vst [vmem:[#allocation2 + $0x4] sm:$0xf] %v428
    %437 = vst [vmem:[#allocation2 + $0x20] sm:$0xf] %v429
    %438 = vst [vmem:[#allocation2 + $0x3c] sm:$0xf] %v430
    %439 = vst [vmem:[#allocation2 + $0x58] sm:$0xf] %v431
    %440 = vst [vmem:[#allocation2 + $0x74] sm:$0xf] %v432
    %441 = vst [vmem:[#allocation2 + $0x90] sm:$0xf] %v433
    %442 = vst [vmem:[#allocation2 + $0xac] sm:$0xf] %v434
    %443 = vst [vmem:[#allocation2 + $0xc8] sm:$0xf] %v435
    %v444 = vmax.f32 %v401, 0.0
    %v445 = vmax.f32 %v403, 0.0
    %v446 = vmax.f32 %v406, 0.0
    %v447 = vmax.f32 %v408, 0.0
    %v448 = vmax.f32 %v411, 0.0
    %v449 = vmax.f32 %v413, 0.0
    %v450 = vmax.f32 %v416, 0.0
    %v451 = vmax.f32 %v418, 0.0
    %v452 = vpack.c.bf16 %v444, %v444
    %v453 = vpack.c.bf16 %v445, %v445
    %v454 = vpack.c.bf16 %v446, %v446
    %v455 = vpack.c.bf16 %v447, %v447
    %v456 = vpack.c.bf16 %v448, %v448
    %v457 = vpack.c.bf16 %v449, %v449
    %v458 = vpack.c.bf16 %v450, %v450
    %v459 = vpack.c.bf16 %v451, %v451
    %460 = vst [vmem:[#allocation2 + $0x8] sm:$0xf] %v452
    %461 = vst [vmem:[#allocation2 + $0x24] sm:$0xf] %v453
    %462 = vst [vmem:[#allocation2 + $0x40] sm:$0xf] %v454
    %463 = vst [vmem:[#allocation2 + $0x5c] sm:$0xf] %v455
    %464 = vst [vmem:[#allocation2 + $0x78] sm:$0xf] %v456
    %465 = vst [vmem:[#allocation2 + $0x94] sm:$0xf] %v457
    %466 = vst [vmem:[#allocation2 + $0xb0] sm:$0xf] %v458
    %467 = vst [vmem:[#allocation2 + $0xcc] sm:$0xf] %v459
    %v468 = vld [vmem:[#allocation2 + $0x4] sm:$0xff]
    %v469 = vld [vmem:[#allocation2 + $0x20] sm:$0xff]
    %v470 = vld [vmem:[#allocation2 + $0x3c] sm:$0xff]
    %v471 = vld [vmem:[#allocation2 + $0x58] sm:$0xff]
    %v472 = vld [vmem:[#allocation2 + $0x74] sm:$0xff]
    %v473 = vld [vmem:[#allocation2 + $0x90] sm:$0xff]
    %v474 = vld [vmem:[#allocation2 + $0xac] sm:$0xff]
    %v475 = vld [vmem:[#allocation2 + $0xc8] sm:$0xff]
    %v484 = vunpack.c.l.b16 %v468
    %v485 = vunpack.c.h.b16 %v468
    %v486 = vunpack.c.l.b16 %v469
    %v487 = vunpack.c.h.b16 %v469
    %v488 = vunpack.c.l.b16 %v470
    %v489 = vunpack.c.h.b16 %v470
    %v490 = vunpack.c.l.b16 %v471
    %v491 = vunpack.c.h.b16 %v471
    %v492 = vunpack.c.l.b16 %v472
    %v493 = vunpack.c.h.b16 %v472
    %v494 = vunpack.c.l.b16 %v473
    %v495 = vunpack.c.h.b16 %v473
    %v496 = vunpack.c.l.b16 %v474
    %v497 = vunpack.c.h.b16 %v474
    %v498 = vunpack.c.l.b16 %v475
    %v499 = vunpack.c.h.b16 %v475
    %v500 = vpack.c.b16 %v486, %v484
    %v501 = vpack.c.b16 %v487, %v485
    %v502 = vpack.c.b16 %v490, %v488
    %v503 = vpack.c.b16 %v491, %v489
    %v504 = vpack.c.b16 %v494, %v492
    %v505 = vpack.c.b16 %v495, %v493
    %v506 = vpack.c.b16 %v498, %v496
    %v507 = vpack.c.b16 %v499, %v497
    %516 = vmatpush.bf16.msra.mxu0 0
    %517 = vmatpush.bf16.msra.mxu0 0
    %518 = vmatpush.bf16.msra.mxu0 0
    %519 = vmatpush.bf16.msra.mxu0 0
    %520 = vmatpush.bf16.msra.mxu0 %v506
    %521 = vmatpush.bf16.msra.mxu0 %v504
    %522 = vmatpush.bf16.msra.mxu0 %v502
    %523 = vmatpush.bf16.msra.mxu0 %v500
    %524 = vmatmul.bf16.gmra.mxu0 %v319
    %v525 = vpop.f32.mrf.mxu0
    %v526 = vadd.f32 0.0, %v525
    %v527 = vpop.f32.mrf.mxu0
    %v528 = vadd.f32 0.0, %v527
    %529 = vmatmul.bf16.gmra.mxu0 %v322
    %v530 = vpop.f32.mrf.mxu0
    %v531 = vadd.f32 0.0, %v530
    %v532 = vpop.f32.mrf.mxu0
    %v533 = vadd.f32 0.0, %v532
    %534 = vmatmul.bf16.gmra.mxu0 %v325
    %v535 = vpop.f32.mrf.mxu0
    %v536 = vadd.f32 0.0, %v535
    %v537 = vpop.f32.mrf.mxu0
    %v538 = vadd.f32 0.0, %v537
    %539 = vmatmul.bf16.gmra.mxu0 %v328
    %v540 = vpop.f32.mrf.mxu0
    %v541 = vadd.f32 0.0, %v540
    %v542 = vpop.f32.mrf.mxu0
    %v543 = vadd.f32 0.0, %v542
    %544 = vdwg.mxu0
    %545 = vmatpush.bf16.msra.mxu0 0
    %546 = vmatpush.bf16.msra.mxu0 0
    %547 = vmatpush.bf16.msra.mxu0 0
    %548 = vmatpush.bf16.msra.mxu0 0
    %549 = vmatpush.bf16.msra.mxu0 %v507
    %550 = vmatpush.bf16.msra.mxu0 %v505
    %551 = vmatpush.bf16.msra.mxu0 %v503
    %552 = vmatpush.bf16.msra.mxu0 %v501
    %553 = vmatmul.bf16.gmra.mxu0 %v319
    %v554 = vpop.f32.mrf.mxu0
    %v555 = vadd.f32 0.0, %v554
    %v556 = vpop.f32.mrf.mxu0
    %v557 = vadd.f32 0.0, %v556
    %558 = vmatmul.bf16.gmra.mxu0 %v322
    %v559 = vpop.f32.mrf.mxu0
    %v560 = vadd.f32 0.0, %v559
    %v561 = vpop.f32.mrf.mxu0
    %v562 = vadd.f32 0.0, %v561
    %563 = vmatmul.bf16.gmra.mxu0 %v325
    %v564 = vpop.f32.mrf.mxu0
    %v565 = vadd.f32 0.0, %v564
    %v566 = vpop.f32.mrf.mxu0
    %v567 = vadd.f32 0.0, %v566
    %568 = vmatmul.bf16.gmra.mxu0 %v328
    %v569 = vpop.f32.mrf.mxu0
    %v570 = vadd.f32 0.0, %v569
    %v571 = vpop.f32.mrf.mxu0
    %v572 = vadd.f32 0.0, %v571
    %573 = vdwg.mxu0
    %574 = vmatpush.bf16.msra.mxu0 0
    %575 = vmatpush.bf16.msra.mxu0 0
    %576 = vmatpush.bf16.msra.mxu0 0
    %577 = vmatpush.bf16.msra.mxu0 0
    %578 = vmatpush.bf16.msra.mxu0 %v506
    %579 = vmatpush.bf16.msra.mxu0 %v504
    %580 = vmatpush.bf16.msra.mxu0 %v502
    %581 = vmatpush.bf16.msra.mxu0 %v500
    %582 = vmatmul.bf16.gmra.mxu0 %v380
    %v583 = vpop.f32.mrf.mxu0
    %v584 = vadd.f32 0.0, %v583
    %v585 = vpop.f32.mrf.mxu0
    %v586 = vadd.f32 0.0, %v585
    %587 = vmatmul.bf16.gmra.mxu0 %v383
    %v588 = vpop.f32.mrf.mxu0
    %v589 = vadd.f32 0.0, %v588
    %v590 = vpop.f32.mrf.mxu0
    %v591 = vadd.f32 0.0, %v590
    %592 = vmatmul.bf16.gmra.mxu0 %v386
    %v593 = vpop.f32.mrf.mxu0
    %v594 = vadd.f32 0.0, %v593
    %v595 = vpop.f32.mrf.mxu0
    %v596 = vadd.f32 0.0, %v595
    %597 = vmatmul.bf16.gmra.mxu0 %v389
    %v598 = vpop.f32.mrf.mxu0
    %v599 = vadd.f32 0.0, %v598
    %v600 = vpop.f32.mrf.mxu0
    %v601 = vadd.f32 0.0, %v600
    %602 = vdwg.mxu0
    %603 = vmatpush.bf16.msra.mxu0 0
    %604 = vmatpush.bf16.msra.mxu0 0
    %605 = vmatpush.bf16.msra.mxu0 0
    %606 = vmatpush.bf16.msra.mxu0 0
    %607 = vmatpush.bf16.msra.mxu0 %v507
    %608 = vmatpush.bf16.msra.mxu0 %v505
    %609 = vmatpush.bf16.msra.mxu0 %v503
    %610 = vmatpush.bf16.msra.mxu0 %v501
    %611 = vmatmul.bf16.gmra.mxu0 %v380
    %v612 = vpop.f32.mrf.mxu0
    %v613 = vadd.f32 0.0, %v612
    %v614 = vpop.f32.mrf.mxu0
    %v615 = vadd.f32 0.0, %v614
    %616 = vmatmul.bf16.gmra.mxu0 %v383
    %v617 = vpop.f32.mrf.mxu0
    %v618 = vadd.f32 0.0, %v617
    %v619 = vpop.f32.mrf.mxu0
    %v620 = vadd.f32 0.0, %v619
    %621 = vmatmul.bf16.gmra.mxu0 %v386
    %v622 = vpop.f32.mrf.mxu0
    %v623 = vadd.f32 0.0, %v622
    %v624 = vpop.f32.mrf.mxu0
    %v625 = vadd.f32 0.0, %v624
    %626 = vmatmul.bf16.gmra.mxu0 %v389
    %v627 = vpop.f32.mrf.mxu0
    %v628 = vadd.f32 0.0, %v627
    %v629 = vpop.f32.mrf.mxu0
    %v630 = vadd.f32 0.0, %v629
    %631 = vdwg.mxu0
    %v632 = vmax.f32 %v526, 0.0
    %v633 = vmax.f32 %v555, 0.0
    %v634 = vmax.f32 %v528, 0.0
    %v635 = vmax.f32 %v557, 0.0
    %v636 = vmax.f32 %v531, 0.0
    %v637 = vmax.f32 %v560, 0.0
    %v638 = vmax.f32 %v533, 0.0
    %v639 = vmax.f32 %v562, 0.0
    %v640 = vmax.f32 %v536, 0.0
    %v641 = vmax.f32 %v565, 0.0
    %v642 = vmax.f32 %v538, 0.0
    %v643 = vmax.f32 %v567, 0.0
    %v644 = vmax.f32 %v541, 0.0
    %v645 = vmax.f32 %v570, 0.0
    %v646 = vmax.f32 %v543, 0.0
    %v647 = vmax.f32 %v572, 0.0
    %v648 = vpack.c.bf16 %v633, %v632
    %v649 = vpack.c.bf16 %v635, %v634
    %v650 = vpack.c.bf16 %v637, %v636
    %v651 = vpack.c.bf16 %v639, %v638
    %v652 = vpack.c.bf16 %v641, %v640
    %v653 = vpack.c.bf16 %v643, %v642
    %v654 = vpack.c.bf16 %v645, %v644
    %v655 = vpack.c.bf16 %v647, %v646
    %656 = vst [vmem:[#allocation2 + $0xc] sm:$0xff] %v648
    %657 = vst [vmem:[#allocation2 + $0x28] sm:$0xff] %v649
    %658 = vst [vmem:[#allocation2 + $0x44] sm:$0xff] %v650
    %659 = vst [vmem:[#allocation2 + $0x60] sm:$0xff] %v651
    %660 = vst [vmem:[#allocation2 + $0x7c] sm:$0xff] %v652
    %661 = vst [vmem:[#allocation2 + $0x98] sm:$0xff] %v653
    %662 = vst [vmem:[#allocation2 + $0xb4] sm:$0xff] %v654
    %663 = vst [vmem:[#allocation2 + $0xd0] sm:$0xff] %v655
    %v664 = vmax.f32 %v584, 0.0
    %v665 = vmax.f32 %v613, 0.0
    %v666 = vmax.f32 %v586, 0.0
    %v667 = vmax.f32 %v615, 0.0
    %v668 = vmax.f32 %v589, 0.0
    %v669 = vmax.f32 %v618, 0.0
    %v670 = vmax.f32 %v591, 0.0
    %v671 = vmax.f32 %v620, 0.0
    %v672 = vmax.f32 %v594, 0.0
    %v673 = vmax.f32 %v623, 0.0
    %v674 = vmax.f32 %v596, 0.0
    %v675 = vmax.f32 %v625, 0.0
    %v676 = vmax.f32 %v599, 0.0
    %v677 = vmax.f32 %v628, 0.0
    %v678 = vmax.f32 %v601, 0.0
    %v679 = vmax.f32 %v630, 0.0
    %v680 = vpack.c.bf16 %v665, %v664
    %v681 = vpack.c.bf16 %v667, %v666
    %v682 = vpack.c.bf16 %v669, %v668
    %v683 = vpack.c.bf16 %v671, %v670
    %v684 = vpack.c.bf16 %v673, %v672
    %v685 = vpack.c.bf16 %v675, %v674
    %v686 = vpack.c.bf16 %v677, %v676
    %v687 = vpack.c.bf16 %v679, %v678
    %688 = vst [vmem:[#allocation2 + $0x14] sm:$0xff] %v680
    %689 = vst [vmem:[#allocation2 + $0x30] sm:$0xff] %v681
    %690 = vst [vmem:[#allocation2 + $0x4c] sm:$0xff] %v682
    %691 = vst [vmem:[#allocation2 + $0x68] sm:$0xff] %v683
    %692 = vst [vmem:[#allocation2 + $0x84] sm:$0xff] %v684
    %693 = vst [vmem:[#allocation2 + $0xa0] sm:$0xff] %v685
    %694 = vst [vmem:[#allocation2 + $0xbc] sm:$0xff] %v686
    %695 = vst [vmem:[#allocation2 + $0xd8] sm:$0xff] %v687
    %v696 = vld [vmem:[#allocation2] sm:$0xff]
    %v697 = vld [vmem:[#allocation2 + $0x8] sm:$0xff]
    %v698 = vld [vmem:[#allocation2 + $0x10] sm:$0xff]
    %v699 = vld [vmem:[#allocation2 + $0x18] sm:$0xf]
    %v700 = vld [vmem:[#allocation2 + $0x1c] sm:$0xff]
    %v701 = vld [vmem:[#allocation2 + $0x24] sm:$0xff]
    %v702 = vld [vmem:[#allocation2 + $0x2c] sm:$0xff]
    %v703 = vld [vmem:[#allocation2 + $0x34] sm:$0xf]
    %v704 = vld [vmem:[#allocation2 + $0x38] sm:$0xff]
    %v705 = vld [vmem:[#allocation2 + $0x40] sm:$0xff]
    %v706 = vld [vmem:[#allocation2 + $0x48] sm:$0xff]
    %v707 = vld [vmem:[#allocation2 + $0x50] sm:$0xf]
    %v708 = vld [vmem:[#allocation2 + $0x54] sm:$0xff]
    %v709 = vld [vmem:[#allocation2 + $0x5c] sm:$0xff]
    %v710 = vld [vmem:[#allocation2 + $0x64] sm:$0xff]
    %v711 = vld [vmem:[#allocation2 + $0x6c] sm:$0xf]
    %v712 = vld [vmem:[#allocation2 + $0x70] sm:$0xff]
    %v713 = vld [vmem:[#allocation2 + $0x78] sm:$0xff]
    %v714 = vld [vmem:[#allocation2 + $0x80] sm:$0xff]
    %v715 = vld [vmem:[#allocation2 + $0x88] sm:$0xf]
    %v716 = vld [vmem:[#allocation2 + $0x8c] sm:$0xff]
    %v717 = vld [vmem:[#allocation2 + $0x94] sm:$0xff]
    %v718 = vld [vmem:[#allocation2 + $0x9c] sm:$0xff]
    %v719 = vld [vmem:[#allocation2 + $0xa4] sm:$0xf]
    %v720 = vld [vmem:[#allocation2 + $0xa8] sm:$0xff]
    %v721 = vld [vmem:[#allocation2 + $0xb0] sm:$0xff]
    %v722 = vld [vmem:[#allocation2 + $0xb8] sm:$0xff]
    %v723 = vld [vmem:[#allocation2 + $0xc0] sm:$0xf]
    %v724 = vld [vmem:[#allocation2 + $0xc4] sm:$0xff]
    %v725 = vld [vmem:[#allocation2 + $0xcc] sm:$0xff]
    %v726 = vld [vmem:[#allocation2 + $0xd4] sm:$0xff]
    %v727 = vld [vmem:[#allocation2 + $0xdc] sm:$0xf]
    %v728 = vld [vmem:[#allocation11] sm:$0xf]
    %v729 = vld [vmem:[#allocation11 + $0x4] sm:$0xf]
    %v730 = vld [vmem:[#allocation11 + $0x8] sm:$0xf]
    %v731 = vld [vmem:[#allocation11 + $0xc] sm:$0xf]
    %v732 = vld [vmem:[#allocation11 + $0x10] sm:$0xf]
    %v733 = vld [vmem:[#allocation11 + $0x14] sm:$0xf]
    %v734 = vld [vmem:[#allocation11 + $0x18] sm:$0xf]
    %v735 = vld [vmem:[#allocation11 + $0x1c] sm:$0xf]
    %v736 = vld [vmem:[#allocation11 + $0x20] sm:$0xf]
    %v737 = vld [vmem:[#allocation11 + $0x24] sm:$0xf]
    %v738 = vld [vmem:[#allocation11 + $0x28] sm:$0xf]
    %v739 = vld [vmem:[#allocation11 + $0x2c] sm:$0xf]
    %v740 = vld [vmem:[#allocation11 + $0x30] sm:$0xf]
    %v741 = vld [vmem:[#allocation11 + $0x34] sm:$0xf]
    %v742 = vld [vmem:[#allocation11 + $0x38] sm:$0xf]
    %v743 = vld [vmem:[#allocation11 + $0x3c] sm:$0xf]
    %v744 = vld [vmem:[#allocation11 + $0x40] sm:$0xf]
    %v745 = vld [vmem:[#allocation11 + $0x44] sm:$0xf]
    %v746 = vld [vmem:[#allocation11 + $0x48] sm:$0xf]
    %v747 = vld [vmem:[#allocation11 + $0x4c] sm:$0xf]
    %v748 = vld [vmem:[#allocation11 + $0x50] sm:$0xf]
    %v749 = vld [vmem:[#allocation11 + $0x54] sm:$0xf]
    %v750 = vld [vmem:[#allocation11 + $0x58] sm:$0xf]
    %v751 = vld [vmem:[#allocation11 + $0x5c] sm:$0xf]
    %v752 = vld [vmem:[#allocation11 + $0x60] sm:$0xf]
    %v753 = vld [vmem:[#allocation11 + $0x64] sm:$0xf]
    %v754 = vld [vmem:[#allocation11 + $0x68] sm:$0xf]
    %v755 = vld [vmem:[#allocation11 + $0x6c] sm:$0xf]
    %v756 = vld [vmem:[#allocation11 + $0x70] sm:$0xf]
    %v757 = vld [vmem:[#allocation11 + $0x74] sm:$0xf]
    %v758 = vld [vmem:[#allocation11 + $0x78] sm:$0xf]
    %v759 = vld [vmem:[#allocation11 + $0x7c] sm:$0xf]
    %v760 = vld [vmem:[#allocation11 + $0x80] sm:$0xf]
    %v761 = vld [vmem:[#allocation11 + $0x84] sm:$0xf]
    %v762 = vld [vmem:[#allocation11 + $0x88] sm:$0xf]
    %v763 = vld [vmem:[#allocation11 + $0x8c] sm:$0xf]
    %v764 = vld [vmem:[#allocation11 + $0x90] sm:$0xf]
    %v765 = vld [vmem:[#allocation11 + $0x94] sm:$0xf]
    %v766 = vld [vmem:[#allocation11 + $0x98] sm:$0xf]
    %v767 = vld [vmem:[#allocation11 + $0x9c] sm:$0xf]
    %v768 = vld [vmem:[#allocation11 + $0xa0] sm:$0xf]
    %v769 = vld [vmem:[#allocation11 + $0xa4] sm:$0xf]
    %v770 = vld [vmem:[#allocation11 + $0xa8] sm:$0xf]
    %v771 = vld [vmem:[#allocation11 + $0xac] sm:$0xf]
    %v772 = vld [vmem:[#allocation11 + $0xb0] sm:$0xf]
    %v773 = vld [vmem:[#allocation11 + $0xb4] sm:$0xf]
    %v774 = vld [vmem:[#allocation11 + $0xb8] sm:$0xf]
    %v775 = vld [vmem:[#allocation11 + $0xbc] sm:$0xf]
    %v776 = vld [vmem:[#allocation11 + $0xc0] sm:$0xf]
    %v777 = vld [vmem:[#allocation11 + $0xc4] sm:$0xf]
    %v778 = vld [vmem:[#allocation11 + $0xc8] sm:$0xf]
    %v779 = vld [vmem:[#allocation11 + $0xcc] sm:$0xf]
    %v780 = vld [vmem:[#allocation11 + $0xd0] sm:$0xf]
    %v781 = vld [vmem:[#allocation11 + $0xd4] sm:$0xf]
    %v782 = vld [vmem:[#allocation11 + $0xd8] sm:$0xf]
    %v783 = vld [vmem:[#allocation11 + $0xdc] sm:$0xf]
    %v784 = vld [vmem:[#allocation11 + $0xe0] sm:$0xf]
    %v785 = vld [vmem:[#allocation11 + $0xe4] sm:$0xf]
    %v786 = vld [vmem:[#allocation11 + $0xe8] sm:$0xf]
    %v787 = vld [vmem:[#allocation11 + $0xec] sm:$0xf]
    %v788 = vld [vmem:[#allocation11 + $0xf0] sm:$0xf]
    %v789 = vld [vmem:[#allocation11 + $0xf4] sm:$0xf]
    %v790 = vld [vmem:[#allocation11 + $0xf8] sm:$0xf]
    %v791 = vld [vmem:[#allocation11 + $0xfc] sm:$0xf]
    %v792 = vld [vmem:[#allocation11 + $0x100] sm:$0xf]
    %v793 = vld [vmem:[#allocation11 + $0x104] sm:$0xf]
    %v794 = vld [vmem:[#allocation11 + $0x108] sm:$0xf]
    %v795 = vld [vmem:[#allocation11 + $0x10c] sm:$0xf]
    %v796 = vld [vmem:[#allocation11 + $0x110] sm:$0xf]
    %v797 = vld [vmem:[#allocation11 + $0x114] sm:$0xf]
    %v798 = vld [vmem:[#allocation11 + $0x118] sm:$0xf]
    %v799 = vld [vmem:[#allocation11 + $0x11c] sm:$0xf]
    %v800 = vld [vmem:[#allocation11 + $0x120] sm:$0xf]
    %v801 = vld [vmem:[#allocation11 + $0x124] sm:$0xf]
    %v802 = vld [vmem:[#allocation11 + $0x128] sm:$0xf]
    %v803 = vld [vmem:[#allocation11 + $0x12c] sm:$0xf]
    %v804 = vld [vmem:[#allocation11 + $0x130] sm:$0xf]
    %v805 = vld [vmem:[#allocation11 + $0x134] sm:$0xf]
    %v806 = vld [vmem:[#allocation11 + $0x138] sm:$0xf]
    %v807 = vld [vmem:[#allocation11 + $0x13c] sm:$0xf]
    %v808 = vld [vmem:[#allocation11 + $0x140] sm:$0xf]
    %v809 = vld [vmem:[#allocation11 + $0x144] sm:$0xf]
    %v810 = vld [vmem:[#allocation11 + $0x148] sm:$0xf]
    %v811 = vld [vmem:[#allocation11 + $0x14c] sm:$0xf]
    %v812 = vld [vmem:[#allocation11 + $0x150] sm:$0xf]
    %v813 = vld [vmem:[#allocation11 + $0x154] sm:$0xf]
    %v814 = vld [vmem:[#allocation11 + $0x158] sm:$0xf]
    %v815 = vld [vmem:[#allocation11 + $0x15c] sm:$0xf]
    %v816 = vld [vmem:[#allocation11 + $0x160] sm:$0xf]
    %v817 = vld [vmem:[#allocation11 + $0x164] sm:$0xf]
    %v818 = vld [vmem:[#allocation11 + $0x168] sm:$0xf]
    %v819 = vld [vmem:[#allocation11 + $0x16c] sm:$0xf]
    %v820 = vld [vmem:[#allocation11 + $0x170] sm:$0xf]
    %v821 = vld [vmem:[#allocation11 + $0x174] sm:$0xf]
    %v822 = vld [vmem:[#allocation11 + $0x178] sm:$0xf]
    %v823 = vld [vmem:[#allocation11 + $0x17c] sm:$0xf]
    %v824 = vld [vmem:[#allocation11 + $0x180] sm:$0xf]
    %v825 = vld [vmem:[#allocation11 + $0x184] sm:$0xf]
    %v826 = vld [vmem:[#allocation11 + $0x188] sm:$0xf]
    %v827 = vld [vmem:[#allocation11 + $0x18c] sm:$0xf]
    %v828 = vld [vmem:[#allocation11 + $0x190] sm:$0xf]
    %v829 = vld [vmem:[#allocation11 + $0x194] sm:$0xf]
    %v830 = vld [vmem:[#allocation11 + $0x198] sm:$0xf]
    %v831 = vld [vmem:[#allocation11 + $0x19c] sm:$0xf]
    %v832 = vld [vmem:[#allocation11 + $0x1a0] sm:$0xf]
    %v833 = vld [vmem:[#allocation11 + $0x1a4] sm:$0xf]
    %v834 = vld [vmem:[#allocation11 + $0x1a8] sm:$0xf]
    %v835 = vld [vmem:[#allocation11 + $0x1ac] sm:$0xf]
    %v836 = vld [vmem:[#allocation11 + $0x1b0] sm:$0xf]
    %v837 = vld [vmem:[#allocation11 + $0x1b4] sm:$0xf]
    %v838 = vld [vmem:[#allocation11 + $0x1b8] sm:$0xf]
    %v839 = vld [vmem:[#allocation11 + $0x1bc] sm:$0xf]
    %v872 = vunpack.c.l.b16 %v696
    %v873 = vunpack.c.h.b16 %v696
    %v874 = vunpack.c.l.b16 %v697
    %v875 = vunpack.c.h.b16 %v697
    %v876 = vunpack.c.l.b16 %v698
    %v877 = vunpack.c.h.b16 %v698
    %v878 = vunpack.c.l.b16 %v699
    %v879 = vunpack.c.l.b16 %v700
    %v880 = vunpack.c.h.b16 %v700
    %v881 = vunpack.c.l.b16 %v701
    %v882 = vunpack.c.h.b16 %v701
    %v883 = vunpack.c.l.b16 %v702
    %v884 = vunpack.c.h.b16 %v702
    %v885 = vunpack.c.l.b16 %v703
    %v886 = vunpack.c.l.b16 %v704
    %v887 = vunpack.c.h.b16 %v704
    %v888 = vunpack.c.l.b16 %v705
    %v889 = vunpack.c.h.b16 %v705
    %v890 = vunpack.c.l.b16 %v706
    %v891 = vunpack.c.h.b16 %v706
    %v892 = vunpack.c.l.b16 %v707
    %v893 = vunpack.c.l.b16 %v708
    %v894 = vunpack.c.h.b16 %v708
    %v895 = vunpack.c.l.b16 %v709
    %v896 = vunpack.c.h.b16 %v709
    %v897 = vunpack.c.l.b16 %v710
    %v898 = vunpack.c.h.b16 %v710
    %v899 = vunpack.c.l.b16 %v711
    %v900 = vunpack.c.l.b16 %v712
    %v901 = vunpack.c.h.b16 %v712
    %v902 = vunpack.c.l.b16 %v713
    %v903 = vunpack.c.h.b16 %v713
    %v904 = vunpack.c.l.b16 %v714
    %v905 = vunpack.c.h.b16 %v714
    %v906 = vunpack.c.l.b16 %v715
    %v907 = vunpack.c.l.b16 %v716
    %v908 = vunpack.c.h.b16 %v716
    %v909 = vunpack.c.l.b16 %v717
    %v910 = vunpack.c.h.b16 %v717
    %v911 = vunpack.c.l.b16 %v718
    %v912 = vunpack.c.h.b16 %v718
    %v913 = vunpack.c.l.b16 %v719
    %v914 = vunpack.c.l.b16 %v720
    %v915 = vunpack.c.h.b16 %v720
    %v916 = vunpack.c.l.b16 %v721
    %v917 = vunpack.c.h.b16 %v721
    %v918 = vunpack.c.l.b16 %v722
    %v919 = vunpack.c.h.b16 %v722
    %v920 = vunpack.c.l.b16 %v723
    %v921 = vunpack.c.l.b16 %v724
    %v922 = vunpack.c.h.b16 %v724
    %v923 = vunpack.c.l.b16 %v725
    %v924 = vunpack.c.h.b16 %v725
    %v925 = vunpack.c.l.b16 %v726
    %v926 = vunpack.c.h.b16 %v726
    %v927 = vunpack.c.l.b16 %v727
    %v928 = vpack.c.b16 %v879, %v872
    %v929 = vpack.c.b16 %v880, %v873
    %v930 = vpack.c.b16 %v881, %v874
    %v931 = vpack.c.b16 %v882, %v875
    %v932 = vpack.c.b16 %v883, %v876
    %v933 = vpack.c.b16 %v884, %v877
    %v934 = vpack.c.b16 %v885, %v878
    %v935 = vpack.c.b16 %v893, %v886
    %v936 = vpack.c.b16 %v894, %v887
    %v937 = vpack.c.b16 %v895, %v888
    %v938 = vpack.c.b16 %v896, %v889
    %v939 = vpack.c.b16 %v897, %v890
    %v940 = vpack.c.b16 %v898, %v891
    %v941 = vpack.c.b16 %v899, %v892
    %v942 = vpack.c.b16 %v907, %v900
    %v943 = vpack.c.b16 %v908, %v901
    %v944 = vpack.c.b16 %v909, %v902
    %v945 = vpack.c.b16 %v910, %v903
    %v946 = vpack.c.b16 %v911, %v904
    %v947 = vpack.c.b16 %v912, %v905
    %v948 = vpack.c.b16 %v913, %v906
    %v949 = vpack.c.b16 %v921, %v914
    %v950 = vpack.c.b16 %v922, %v915
    %v951 = vpack.c.b16 %v923, %v916
    %v952 = vpack.c.b16 %v924, %v917
    %v953 = vpack.c.b16 %v925, %v918
    %v954 = vpack.c.b16 %v926, %v919
    %v955 = vpack.c.b16 %v927, %v920
    %v1096 = vunpack.c.l.b16 %v728
    %v1097 = vunpack.c.l.b16 %v729
    %v1098 = vunpack.c.l.b16 %v730
    %v1099 = vunpack.c.l.b16 %v731
    %v1100 = vunpack.c.l.b16 %v732
    %v1101 = vunpack.c.l.b16 %v733
    %v1102 = vunpack.c.l.b16 %v734
    %v1103 = vunpack.c.l.b16 %v735
    %v1104 = vunpack.c.l.b16 %v736
    %v1105 = vunpack.c.l.b16 %v737
    %v1106 = vunpack.c.l.b16 %v738
    %v1107 = vunpack.c.l.b16 %v739
    %v1108 = vunpack.c.l.b16 %v740
    %v1109 = vunpack.c.l.b16 %v741
    %v1110 = vunpack.c.l.b16 %v742
    %v1111 = vunpack.c.l.b16 %v743
    %v1112 = vunpack.c.l.b16 %v744
    %v1113 = vunpack.c.l.b16 %v745
    %v1114 = vunpack.c.l.b16 %v746
    %v1115 = vunpack.c.l.b16 %v747
    %v1116 = vunpack.c.l.b16 %v748
    %v1117 = vunpack.c.l.b16 %v749
    %v1118 = vunpack.c.l.b16 %v750
    %v1119 = vunpack.c.l.b16 %v751
    %v1120 = vunpack.c.l.b16 %v752
    %v1121 = vunpack.c.l.b16 %v753
    %v1122 = vunpack.c.l.b16 %v754
    %v1123 = vunpack.c.l.b16 %v755
    %v1124 = vunpack.c.l.b16 %v756
    %v1125 = vunpack.c.l.b16 %v757
    %v1126 = vunpack.c.l.b16 %v758
    %v1127 = vunpack.c.l.b16 %v759
    %v1128 = vunpack.c.l.b16 %v760
    %v1129 = vunpack.c.l.b16 %v761
    %v1130 = vunpack.c.l.b16 %v762
    %v1131 = vunpack.c.l.b16 %v763
    %v1132 = vunpack.c.l.b16 %v764
    %v1133 = vunpack.c.l.b16 %v765
    %v1134 = vunpack.c.l.b16 %v766
    %v1135 = vunpack.c.l.b16 %v767
    %v1136 = vunpack.c.l.b16 %v768
    %v1137 = vunpack.c.l.b16 %v769
    %v1138 = vunpack.c.l.b16 %v770
    %v1139 = vunpack.c.l.b16 %v771
    %v1140 = vunpack.c.l.b16 %v772
    %v1141 = vunpack.c.l.b16 %v773
    %v1142 = vunpack.c.l.b16 %v774
    %v1143 = vunpack.c.l.b16 %v775
    %v1144 = vunpack.c.l.b16 %v776
    %v1145 = vunpack.c.l.b16 %v777
    %v1146 = vunpack.c.l.b16 %v778
    %v1147 = vunpack.c.l.b16 %v779
    %v1148 = vunpack.c.l.b16 %v780
    %v1149 = vunpack.c.l.b16 %v781
    %v1150 = vunpack.c.l.b16 %v782
    %v1151 = vunpack.c.l.b16 %v783
    %v1152 = vunpack.c.l.b16 %v784
    %v1153 = vunpack.c.l.b16 %v785
    %v1154 = vunpack.c.l.b16 %v786
    %v1155 = vunpack.c.l.b16 %v787
    %v1156 = vunpack.c.l.b16 %v788
    %v1157 = vunpack.c.l.b16 %v789
    %v1158 = vunpack.c.l.b16 %v790
    %v1159 = vunpack.c.l.b16 %v791
    %v1160 = vunpack.c.l.b16 %v792
    %v1161 = vunpack.c.l.b16 %v793
    %v1162 = vunpack.c.l.b16 %v794
    %v1163 = vunpack.c.l.b16 %v795
    %v1164 = vunpack.c.l.b16 %v796
    %v1165 = vunpack.c.l.b16 %v797
    %v1166 = vunpack.c.l.b16 %v798
    %v1167 = vunpack.c.l.b16 %v799
    %v1168 = vunpack.c.l.b16 %v800
    %v1169 = vunpack.c.l.b16 %v801
    %v1170 = vunpack.c.l.b16 %v802
    %v1171 = vunpack.c.l.b16 %v803
    %v1172 = vunpack.c.l.b16 %v804
    %v1173 = vunpack.c.l.b16 %v805
    %v1174 = vunpack.c.l.b16 %v806
    %v1175 = vunpack.c.l.b16 %v807
    %v1176 = vunpack.c.l.b16 %v808
    %v1177 = vunpack.c.l.b16 %v809
    %v1178 = vunpack.c.l.b16 %v810
    %v1179 = vunpack.c.l.b16 %v811
    %v1180 = vunpack.c.l.b16 %v812
    %v1181 = vunpack.c.l.b16 %v813
    %v1182 = vunpack.c.l.b16 %v814
    %v1183 = vunpack.c.l.b16 %v815
    %v1184 = vunpack.c.l.b16 %v816
    %v1185 = vunpack.c.l.b16 %v817
    %v1186 = vunpack.c.l.b16 %v818
    %v1187 = vunpack.c.l.b16 %v819
    %v1188 = vunpack.c.l.b16 %v820
    %v1189 = vunpack.c.l.b16 %v821
    %v1190 = vunpack.c.l.b16 %v822
    %v1191 = vunpack.c.l.b16 %v823
    %v1192 = vunpack.c.l.b16 %v824
    %v1193 = vunpack.c.l.b16 %v825
    %v1194 = vunpack.c.l.b16 %v826
    %v1195 = vunpack.c.l.b16 %v827
    %v1196 = vunpack.c.l.b16 %v828
    %v1197 = vunpack.c.l.b16 %v829
    %v1198 = vunpack.c.l.b16 %v830
    %v1199 = vunpack.c.l.b16 %v831
    %v1200 = vunpack.c.l.b16 %v832
    %v1201 = vunpack.c.l.b16 %v833
    %v1202 = vunpack.c.l.b16 %v834
    %v1203 = vunpack.c.l.b16 %v835
    %v1204 = vunpack.c.l.b16 %v836
    %v1205 = vunpack.c.l.b16 %v837
    %v1206 = vunpack.c.l.b16 %v838
    %v1207 = vunpack.c.l.b16 %v839
    %v1208 = vpack.c.b16 %v1097, %v1096
    %v1209 = vpack.c.b16 %v1099, %v1098
    %v1210 = vpack.c.b16 %v1101, %v1100
    %v1211 = vpack.c.b16 %v1103, %v1102
    %v1212 = vpack.c.b16 %v1105, %v1104
    %v1213 = vpack.c.b16 %v1107, %v1106
    %v1214 = vpack.c.b16 %v1109, %v1108
    %v1215 = vpack.c.b16 %v1111, %v1110
    %v1216 = vpack.c.b16 %v1113, %v1112
    %v1217 = vpack.c.b16 %v1115, %v1114
    %v1218 = vpack.c.b16 %v1117, %v1116
    %v1219 = vpack.c.b16 %v1119, %v1118
    %v1220 = vpack.c.b16 %v1121, %v1120
    %v1221 = vpack.c.b16 %v1123, %v1122
    %v1222 = vpack.c.b16 %v1125, %v1124
    %v1223 = vpack.c.b16 %v1127, %v1126
    %v1224 = vpack.c.b16 %v1129, %v1128
    %v1225 = vpack.c.b16 %v1131, %v1130
    %v1226 = vpack.c.b16 %v1133, %v1132
    %v1227 = vpack.c.b16 %v1135, %v1134
    %v1228 = vpack.c.b16 %v1137, %v1136
    %v1229 = vpack.c.b16 %v1139, %v1138
    %v1230 = vpack.c.b16 %v1141, %v1140
    %v1231 = vpack.c.b16 %v1143, %v1142
    %v1232 = vpack.c.b16 %v1145, %v1144
    %v1233 = vpack.c.b16 %v1147, %v1146
    %v1234 = vpack.c.b16 %v1149, %v1148
    %v1235 = vpack.c.b16 %v1151, %v1150
    %v1236 = vpack.c.b16 %v1153, %v1152
    %v1237 = vpack.c.b16 %v1155, %v1154
    %v1238 = vpack.c.b16 %v1157, %v1156
    %v1239 = vpack.c.b16 %v1159, %v1158
    %v1240 = vpack.c.b16 %v1161, %v1160
    %v1241 = vpack.c.b16 %v1163, %v1162
    %v1242 = vpack.c.b16 %v1165, %v1164
    %v1243 = vpack.c.b16 %v1167, %v1166
    %v1244 = vpack.c.b16 %v1169, %v1168
    %v1245 = vpack.c.b16 %v1171, %v1170
    %v1246 = vpack.c.b16 %v1173, %v1172
    %v1247 = vpack.c.b16 %v1175, %v1174
    %v1248 = vpack.c.b16 %v1177, %v1176
    %v1249 = vpack.c.b16 %v1179, %v1178
    %v1250 = vpack.c.b16 %v1181, %v1180
    %v1251 = vpack.c.b16 %v1183, %v1182
    %v1252 = vpack.c.b16 %v1185, %v1184
    %v1253 = vpack.c.b16 %v1187, %v1186
    %v1254 = vpack.c.b16 %v1189, %v1188
    %v1255 = vpack.c.b16 %v1191, %v1190
    %v1256 = vpack.c.b16 %v1193, %v1192
    %v1257 = vpack.c.b16 %v1195, %v1194
    %v1258 = vpack.c.b16 %v1197, %v1196
    %v1259 = vpack.c.b16 %v1199, %v1198
    %v1260 = vpack.c.b16 %v1201, %v1200
    %v1261 = vpack.c.b16 %v1203, %v1202
    %v1262 = vpack.c.b16 %v1205, %v1204
    %v1263 = vpack.c.b16 %v1207, %v1206
    %1320 = vmatpush.bf16.msra.mxu0 %v1215
    %1321 = vmatpush.bf16.msra.mxu0 %v1214
    %1322 = vmatpush.bf16.msra.mxu0 %v1213
    %1323 = vmatpush.bf16.msra.mxu0 %v1212
    %1324 = vmatpush.bf16.msra.mxu0 %v1211
    %1325 = vmatpush.bf16.msra.mxu0 %v1210
    %1326 = vmatpush.bf16.msra.mxu0 %v1209
    %1327 = vmatpush.bf16.msra.mxu0 %v1208
    %1328 = vmatmul.bf16.gmra.mxu0 %v928
    %v1329 = vpop.f32.mrf.mxu0
    %v1330 = vadd.f32 0.0, %v1329
    %v1331 = vpop.f32.mrf.mxu0
    %v1332 = vadd.f32 0.0, %v1331
    %1333 = vmatmul.bf16.gmra.mxu0 %v935
    %v1334 = vpop.f32.mrf.mxu0
    %v1335 = vadd.f32 0.0, %v1334
    %v1336 = vpop.f32.mrf.mxu0
    %v1337 = vadd.f32 0.0, %v1336
    %1338 = vmatmul.bf16.gmra.mxu0 %v942
    %v1339 = vpop.f32.mrf.mxu0
    %v1340 = vadd.f32 0.0, %v1339
    %v1341 = vpop.f32.mrf.mxu0
    %v1342 = vadd.f32 0.0, %v1341
    %1343 = vmatmul.bf16.gmra.mxu0 %v949
    %v1344 = vpop.f32.mrf.mxu0
    %v1345 = vadd.f32 0.0, %v1344
    %v1346 = vpop.f32.mrf.mxu0
    %v1347 = vadd.f32 0.0, %v1346
    %1348 = vdwg.mxu0
    %1349 = vmatpush.bf16.msra.mxu0 %v1223
    %1350 = vmatpush.bf16.msra.mxu0 %v1222
    %1351 = vmatpush.bf16.msra.mxu0 %v1221
    %1352 = vmatpush.bf16.msra.mxu0 %v1220
    %1353 = vmatpush.bf16.msra.mxu0 %v1219
    %1354 = vmatpush.bf16.msra.mxu0 %v1218
    %1355 = vmatpush.bf16.msra.mxu0 %v1217
    %1356 = vmatpush.bf16.msra.mxu0 %v1216
    %1357 = vmatmul.bf16.gmra.mxu0 %v929
    %v1358 = vpop.f32.mrf.mxu0
    %v1359 = vadd.f32 %v1330, %v1358
    %v1360 = vpop.f32.mrf.mxu0
    %v1361 = vadd.f32 %v1332, %v1360
    %1362 = vmatmul.bf16.gmra.mxu0 %v936
    %v1363 = vpop.f32.mrf.mxu0
    %v1364 = vadd.f32 %v1335, %v1363
    %v1365 = vpop.f32.mrf.mxu0
    %v1366 = vadd.f32 %v1337, %v1365
    %1367 = vmatmul.bf16.gmra.mxu0 %v943
    %v1368 = vpop.f32.mrf.mxu0
    %v1369 = vadd.f32 %v1340, %v1368
    %v1370 = vpop.f32.mrf.mxu0
    %v1371 = vadd.f32 %v1342, %v1370
    %1372 = vmatmul.bf16.gmra.mxu0 %v950
    %v1373 = vpop.f32.mrf.mxu0
    %v1374 = vadd.f32 %v1345, %v1373
    %v1375 = vpop.f32.mrf.mxu0
    %v1376 = vadd.f32 %v1347, %v1375
    %1377 = vdwg.mxu0
    %1378 = vmatpush.bf16.msra.mxu0 %v1231
    %1379 = vmatpush.bf16.msra.mxu0 %v1230
    %1380 = vmatpush.bf16.msra.mxu0 %v1229
    %1381 = vmatpush.bf16.msra.mxu0 %v1228
    %1382 = vmatpush.bf16.msra.mxu0 %v1227
    %1383 = vmatpush.bf16.msra.mxu0 %v1226
    %1384 = vmatpush.bf16.msra.mxu0 %v1225
    %1385 = vmatpush.bf16.msra.mxu0 %v1224
    %1386 = vmatmul.bf16.gmra.mxu0 %v930
    %v1387 = vpop.f32.mrf.mxu0
    %v1388 = vadd.f32 %v1359, %v1387
    %v1389 = vpop.f32.mrf.mxu0
    %v1390 = vadd.f32 %v1361, %v1389
    %1391 = vmatmul.bf16.gmra.mxu0 %v937
    %v1392 = vpop.f32.mrf.mxu0
    %v1393 = vadd.f32 %v1364, %v1392
    %v1394 = vpop.f32.mrf.mxu0
    %v1395 = vadd.f32 %v1366, %v1394
    %1396 = vmatmul.bf16.gmra.mxu0 %v944
    %v1397 = vpop.f32.mrf.mxu0
    %v1398 = vadd.f32 %v1369, %v1397
    %v1399 = vpop.f32.mrf.mxu0
    %v1400 = vadd.f32 %v1371, %v1399
    %1401 = vmatmul.bf16.gmra.mxu0 %v951
    %v1402 = vpop.f32.mrf.mxu0
    %v1403 = vadd.f32 %v1374, %v1402
    %v1404 = vpop.f32.mrf.mxu0
    %v1405 = vadd.f32 %v1376, %v1404
    %1406 = vdwg.mxu0
    %1407 = vmatpush.bf16.msra.mxu0 %v1239
    %1408 = vmatpush.bf16.msra.mxu0 %v1238
    %1409 = vmatpush.bf16.msra.mxu0 %v1237
    %1410 = vmatpush.bf16.msra.mxu0 %v1236
    %1411 = vmatpush.bf16.msra.mxu0 %v1235
    %1412 = vmatpush.bf16.msra.mxu0 %v1234
    %1413 = vmatpush.bf16.msra.mxu0 %v1233
    %1414 = vmatpush.bf16.msra.mxu0 %v1232
    %1415 = vmatmul.bf16.gmra.mxu0 %v931
    %v1416 = vpop.f32.mrf.mxu0
    %v1417 = vadd.f32 %v1388, %v1416
    %v1418 = vpop.f32.mrf.mxu0
    %v1419 = vadd.f32 %v1390, %v1418
    %1420 = vmatmul.bf16.gmra.mxu0 %v938
    %v1421 = vpop.f32.mrf.mxu0
    %v1422 = vadd.f32 %v1393, %v1421
    %v1423 = vpop.f32.mrf.mxu0
    %v1424 = vadd.f32 %v1395, %v1423
    %1425 = vmatmul.bf16.gmra.mxu0 %v945
    %v1426 = vpop.f32.mrf.mxu0
    %v1427 = vadd.f32 %v1398, %v1426
    %v1428 = vpop.f32.mrf.mxu0
    %v1429 = vadd.f32 %v1400, %v1428
    %1430 = vmatmul.bf16.gmra.mxu0 %v952
    %v1431 = vpop.f32.mrf.mxu0
    %v1432 = vadd.f32 %v1403, %v1431
    %v1433 = vpop.f32.mrf.mxu0
    %v1434 = vadd.f32 %v1405, %v1433
    %1435 = vdwg.mxu0
    %1436 = vmatpush.bf16.msra.mxu0 %v1247
    %1437 = vmatpush.bf16.msra.mxu0 %v1246
    %1438 = vmatpush.bf16.msra.mxu0 %v1245
    %1439 = vmatpush.bf16.msra.mxu0 %v1244
    %1440 = vmatpush.bf16.msra.mxu0 %v1243
    %1441 = vmatpush.bf16.msra.mxu0 %v1242
    %1442 = vmatpush.bf16.msra.mxu0 %v1241
    %1443 = vmatpush.bf16.msra.mxu0 %v1240
    %1444 = vmatmul.bf16.gmra.mxu0 %v932
    %v1445 = vpop.f32.mrf.mxu0
    %v1446 = vadd.f32 %v1417, %v1445
    %v1447 = vpop.f32.mrf.mxu0
    %v1448 = vadd.f32 %v1419, %v1447
    %1449 = vmatmul.bf16.gmra.mxu0 %v939
    %v1450 = vpop.f32.mrf.mxu0
    %v1451 = vadd.f32 %v1422, %v1450
    %v1452 = vpop.f32.mrf.mxu0
    %v1453 = vadd.f32 %v1424, %v1452
    %1454 = vmatmul.bf16.gmra.mxu0 %v946
    %v1455 = vpop.f32.mrf.mxu0
    %v1456 = vadd.f32 %v1427, %v1455
    %v1457 = vpop.f32.mrf.mxu0
    %v1458 = vadd.f32 %v1429, %v1457
    %1459 = vmatmul.bf16.gmra.mxu0 %v953
    %v1460 = vpop.f32.mrf.mxu0
    %v1461 = vadd.f32 %v1432, %v1460
    %v1462 = vpop.f32.mrf.mxu0
    %v1463 = vadd.f32 %v1434, %v1462
    %1464 = vdwg.mxu0
    %1465 = vmatpush.bf16.msra.mxu0 %v1255
    %1466 = vmatpush.bf16.msra.mxu0 %v1254
    %1467 = vmatpush.bf16.msra.mxu0 %v1253
    %1468 = vmatpush.bf16.msra.mxu0 %v1252
    %1469 = vmatpush.bf16.msra.mxu0 %v1251
    %1470 = vmatpush.bf16.msra.mxu0 %v1250
    %1471 = vmatpush.bf16.msra.mxu0 %v1249
    %1472 = vmatpush.bf16.msra.mxu0 %v1248
    %1473 = vmatmul.bf16.gmra.mxu0 %v933
    %v1474 = vpop.f32.mrf.mxu0
    %v1475 = vadd.f32 %v1446, %v1474
    %v1476 = vpop.f32.mrf.mxu0
    %v1477 = vadd.f32 %v1448, %v1476
    %1478 = vmatmul.bf16.gmra.mxu0 %v940
    %v1479 = vpop.f32.mrf.mxu0
    %v1480 = vadd.f32 %v1451, %v1479
    %v1481 = vpop.f32.mrf.mxu0
    %v1482 = vadd.f32 %v1453, %v1481
    %1483 = vmatmul.bf16.gmra.mxu0 %v947
    %v1484 = vpop.f32.mrf.mxu0
    %v1485 = vadd.f32 %v1456, %v1484
    %v1486 = vpop.f32.mrf.mxu0
    %v1487 = vadd.f32 %v1458, %v1486
    %1488 = vmatmul.bf16.gmra.mxu0 %v954
    %v1489 = vpop.f32.mrf.mxu0
    %v1490 = vadd.f32 %v1461, %v1489
    %v1491 = vpop.f32.mrf.mxu0
    %v1492 = vadd.f32 %v1463, %v1491
    %1493 = vdwg.mxu0
    %1494 = vmatpush.bf16.msra.mxu0 %v1263
    %1495 = vmatpush.bf16.msra.mxu0 %v1262
    %1496 = vmatpush.bf16.msra.mxu0 %v1261
    %1497 = vmatpush.bf16.msra.mxu0 %v1260
    %1498 = vmatpush.bf16.msra.mxu0 %v1259
    %1499 = vmatpush.bf16.msra.mxu0 %v1258
    %1500 = vmatpush.bf16.msra.mxu0 %v1257
    %1501 = vmatpush.bf16.msra.mxu0 %v1256
    %1502 = vmatmul.bf16.gmra.mxu0 %v934
    %v1503 = vpop.f32.mrf.mxu0
    %v1504 = vadd.f32 %v1475, %v1503
    %v1505 = vpop.f32.mrf.mxu0
    %v1506 = vadd.f32 %v1477, %v1505
    %1507 = vmatmul.bf16.gmra.mxu0 %v941
    %v1508 = vpop.f32.mrf.mxu0
    %v1509 = vadd.f32 %v1480, %v1508
    %v1510 = vpop.f32.mrf.mxu0
    %v1511 = vadd.f32 %v1482, %v1510
    %1512 = vmatmul.bf16.gmra.mxu0 %v948
    %v1513 = vpop.f32.mrf.mxu0
    %v1514 = vadd.f32 %v1485, %v1513
    %v1515 = vpop.f32.mrf.mxu0
    %v1516 = vadd.f32 %v1487, %v1515
    %1517 = vmatmul.bf16.gmra.mxu0 %v955
    %v1518 = vpop.f32.mrf.mxu0
    %v1519 = vadd.f32 %v1490, %v1518
    %v1520 = vpop.f32.mrf.mxu0
    %v1521 = vadd.f32 %v1492, %v1520
    %1522 = vdwg.mxu0
    %v1523 = vlaneseq
    %v1524 = vand.u32 %v1523, 127
    %vm1525 = vcmp.lt.s32.totalorder %v1524, 8
    %v1526 = vsel %vm1525, %v1504, -1e+30
    %v1527 = vsel %vm1525, %v1506, -1e+30
    %v1528 = vsel %vm1525, %v1509, -1e+30
    %v1529 = vsel %vm1525, %v1511, -1e+30
    %v1530 = vsel %vm1525, %v1514, -1e+30
    %v1531 = vsel %vm1525, %v1516, -1e+30
    %v1532 = vsel %vm1525, %v1519, -1e+30
    %v1533 = vsel %vm1525, %v1521, -1e+30
    %1534 = vmax.xlane.f32.xlu0 %v1526
    %v1535 = vpop.xlane.xlu0 %1534
    %1536 = vmax.xlane.f32.xlu0 %v1527
    %v1537 = vpop.xlane.xlu0 %1536
    %1538 = vmax.xlane.f32.xlu0 %v1528
    %v1539 = vpop.xlane.xlu0 %1538
    %1540 = vmax.xlane.f32.xlu0 %v1529
    %v1541 = vpop.xlane.xlu0 %1540
    %1542 = vmax.xlane.f32.xlu0 %v1530
    %v1543 = vpop.xlane.xlu0 %1542
    %1544 = vmax.xlane.f32.xlu0 %v1531
    %v1545 = vpop.xlane.xlu0 %1544
    %1546 = vmax.xlane.f32.xlu0 %v1532
    %v1547 = vpop.xlane.xlu0 %1546
    %1548 = vmax.xlane.f32.xlu0 %v1533
    %v1549 = vpop.xlane.xlu0 %1548
    %v1550 = vsub.f32 %v1526, %v1535
    %v1551 = vsub.f32 %v1527, %v1537
    %v1552 = vsub.f32 %v1528, %v1539
    %v1553 = vsub.f32 %v1529, %v1541
    %v1554 = vsub.f32 %v1530, %v1543
    %v1555 = vsub.f32 %v1531, %v1545
    %v1556 = vsub.f32 %v1532, %v1547
    %v1557 = vsub.f32 %v1533, %v1549
    %v1558 = vmul.f32 %v1550, 1.442695
    %v1559 = vpow.pop %v1558
    %v1560 = vmul.f32 %v1551, 1.442695
    %v1561 = vpow.pop %v1560
    %v1562 = vmul.f32 %v1552, 1.442695
    %v1563 = vpow.pop %v1562
    %v1564 = vmul.f32 %v1553, 1.442695
    %v1565 = vpow.pop %v1564
    %v1566 = vmul.f32 %v1554, 1.442695
    %v1567 = vpow.pop %v1566
    %v1568 = vmul.f32 %v1555, 1.442695
    %v1569 = vpow.pop %v1568
    %v1570 = vmul.f32 %v1556, 1.442695
    %v1571 = vpow.pop %v1570
    %v1572 = vmul.f32 %v1557, 1.442695
    %v1573 = vpow.pop %v1572
    %1574 = vadd.xlane.f32.xlu0 %v1559
    %v1575 = vpop.xlane.xlu0 %1574
    %1576 = vadd.xlane.f32.xlu0 %v1561
    %v1577 = vpop.xlane.xlu0 %1576
    %1578 = vadd.xlane.f32.xlu0 %v1563
    %v1579 = vpop.xlane.xlu0 %1578
    %1580 = vadd.xlane.f32.xlu0 %v1565
    %v1581 = vpop.xlane.xlu0 %1580
    %1582 = vadd.xlane.f32.xlu0 %v1567
    %v1583 = vpop.xlane.xlu0 %1582
    %1584 = vadd.xlane.f32.xlu0 %v1569
    %v1585 = vpop.xlane.xlu0 %1584
    %1586 = vadd.xlane.f32.xlu0 %v1571
    %v1587 = vpop.xlane.xlu0 %1586
    %1588 = vadd.xlane.f32.xlu0 %v1573
    %v1589 = vpop.xlane.xlu0 %1588
    %v1590 = vrcp.pop %v1575
    %v1591 = vrcp.pop %v1577
    %v1592 = vrcp.pop %v1579
    %v1593 = vrcp.pop %v1581
    %v1594 = vrcp.pop %v1583
    %v1595 = vrcp.pop %v1585
    %v1596 = vrcp.pop %v1587
    %v1597 = vrcp.pop %v1589
    %v1598 = vmul.f32 %v1559, %v1590
    %v1599 = vmul.f32 %v1561, %v1591
    %v1600 = vmul.f32 %v1563, %v1592
    %v1601 = vmul.f32 %v1565, %v1593
    %v1602 = vmul.f32 %v1567, %v1594
    %v1603 = vmul.f32 %v1569, %v1595
    %v1604 = vmul.f32 %v1571, %v1596
    %v1605 = vmul.f32 %v1573, %v1597
    %1606 = vst [vmem:[#allocation12] sm:$0xff] %v1598
    %1607 = vst [vmem:[#allocation12 + $0x8] sm:$0xff] %v1599
    %1608 = vst [vmem:[#allocation12 + $0x10] sm:$0xff] %v1600
    %1609 = vst [vmem:[#allocation12 + $0x18] sm:$0xff] %v1601
    %1610 = vst [vmem:[#allocation12 + $0x20] sm:$0xff] %v1602
    %1611 = vst [vmem:[#allocation12 + $0x28] sm:$0xff] %v1603
    %1612 = vst [vmem:[#allocation12 + $0x30] sm:$0xff] %v1604
    %1613 = vst [vmem:[#allocation12 + $0x38] sm:$0xff] %v1605
    // Predicated region
    $region42: #{tpu_custom_call.1} parent=1 // pred_check
      _
    $region43: #{tpu_custom_call.1} parent=1 // pred_check_branch
      %1615 = sbr.rel (0) target = $region45
    $region44: #{tpu_custom_call.1} parent=1 // pred_region
      %1617 = vsyncadd [#allocation5], 0
      %s1618 = sshll.u32 [#allocation12], 4
      %s1619 = int_to_ptr.vmem [resolvable:$true] %s1618
      %s1620 = sshll.u32 %s5, 4
      %s1621 = int_to_ptr.hbm [resolvable:$true] %s1620
      %1626 = dma.vmem_to_hbm [thread:$0]  %s1619, 1024, %s1621, [#allocation5], 128, 128, 8
    $region45: #{tpu_custom_call.1} parent=1 // pred_fallthru
      _
    // Predicated region
    $region46: #{tpu_custom_call.1} parent=1 // pred_check
      _
    $region47: #{tpu_custom_call.1} parent=1 // pred_check_branch
      %1628 = sbr.rel (0) target = $region49
    $region48: #{tpu_custom_call.1} parent=1 // pred_region
      %1630 = dma.done [#allocation5], 1024
    $region49: #{tpu_custom_call.1} parent=1 // pred_fallthru
      _
    %1631 = vsyncpa [#allocation4], 1
    %1632 = vsyncpa [#allocation7], 1
    %1633 = vsyncpa [#allocation10], 1
    %1634 = vsyncpa [#allocation5], 1

</llo_original>
